<compile_context>
chip_gen: v7x
topology: tpu7x:2x2x1
jax: 0.10.0
libtpu: 0.0.40
codegen_flags: <defaults>
</compile_context>

<pallas_src>
import math
from functools import lru_cache, partial

import jax
import jax.numpy as jnp
from jax.experimental import pallas as pl
from jax.experimental.pallas import tpu as pltpu

ACT_DTYPE = jnp.bfloat16
_WEIGHT_BLOCK_BUDGET = 4 * 1024 * 1024     # bytes of bf16 weight per block
_VMEM_LIMIT = 32 * 1024 * 1024             # safe on v5e/v6e/v7x


def _round_up(x, m):
    return ((x + m - 1) // m) * m


def _pick_n_tile(K, N, elem_bytes=2):
    """Largest N-tile (full N, else a multiple-of-128 divisor) fitting the budget."""
    if K * N * elem_bytes <= _WEIGHT_BLOCK_BUDGET:
        return N
    best = None
    t = 128
    while t <= N:
        if N % t == 0 and K * t * elem_bytes <= _WEIGHT_BLOCK_BUDGET:
            best = t
        t += 128
    if best is None:
        best = N if N % 128 != 0 else 128
    return best


# ----------------------------------------------------------------------------
# Pallas kernels
# ----------------------------------------------------------------------------
def _mm_kernel(*refs, has_bias, has_res):
    """out = A @ B (+ bias) (+ residual); bf16 in, f32 accumulate, bf16 out."""
    a_ref, b_ref = refs[0], refs[1]
    o_ref = refs[-1]
    idx = 2
    bias_ref = None
    r_ref = None
    if has_bias:
        bias_ref = refs[idx]
        idx += 1
    if has_res:
        r_ref = refs[idx]
        idx += 1
    acc = jnp.dot(a_ref[...], b_ref[...], preferred_element_type=jnp.float32)
    if has_bias:
        acc = acc + bias_ref[...]
    if has_res:
        acc = acc + r_ref[...].astype(jnp.float32)
    o_ref[...] = acc.astype(o_ref.dtype)


@lru_cache(maxsize=None)
def _build_matmul(M, K, N, has_bias, has_res):
    tn = _pick_n_tile(K, N)
    in_specs = [pl.BlockSpec((M, K), lambda j: (0, 0)),
                pl.BlockSpec((K, tn), lambda j: (0, j))]
    if has_bias:
        in_specs.append(pl.BlockSpec((1, tn), lambda j: (0, j)))
    if has_res:
        in_specs.append(pl.BlockSpec((M, tn), lambda j: (0, j)))
    kernel = partial(_mm_kernel, has_bias=has_bias, has_res=has_res)
    f = pl.pallas_call(
        kernel,
        out_shape=jax.ShapeDtypeStruct((M, N), ACT_DTYPE),
        grid_spec=pltpu.PrefetchScalarGridSpec(
            num_scalar_prefetch=0,
            grid=(N // tn,),
            in_specs=in_specs,
            out_specs=pl.BlockSpec((M, tn), lambda j: (0, j))),
        compiler_params=pltpu.CompilerParams(
            dimension_semantics=("parallel",),
            vmem_limit_bytes=_VMEM_LIMIT))
    return jax.jit(f)


def pmatmul(a, w, bias=None, residual=None):
    """(M, K) @ (K, N) with fused bias / residual epilogue.  bf16 operands."""
    M, K = a.shape
    K2, N = w.shape
    assert K == K2
    Mp = M if M % 8 == 0 else _round_up(M, 8)
    a = a.astype(ACT_DTYPE)
    w = w.astype(ACT_DTYPE)
    if Mp != M:
        a = jnp.pad(a, ((0, Mp - M), (0, 0)))
    args = [a, w]
    if bias is not None:
        args.append(bias.astype(jnp.float32))
    if residual is not None:
        r = residual.astype(ACT_DTYPE)
        if Mp != M:
            r = jnp.pad(r, ((0, Mp - M), (0, 0)))
        args.append(r)
    out = _build_matmul(Mp, K, N, bias is not None, residual is not None)(*args)
    if Mp != M:
        out = out[:M]
    return out


def _conv_kernel(*refs, kh, kw, H, W, has_res):
    """Fused stride-1 conv: the kh*kw taps are shifted windows of a flattened,
    once-padded NHWC input; horizontal out-of-frame taps are masked in-kernel."""
    x_ref, w_ref, b_ref = refs[0], refs[1], refs[2]
    r_ref = refs[3] if has_res else None
    o_ref = refs[-1]
    HW = H * W
    tn = o_ref.shape[-1]
    pad_h, pad_w = kh // 2, kw // 2
    wo_idx = jax.lax.broadcasted_iota(jnp.int32, (HW, 1), 0) % W
    acc = jnp.zeros((HW, tn), jnp.float32)
    for ki in range(kh):
        di = ki - pad_h
        if abs(di) >= H:
            continue
        for kj in range(kw):
            dj = kj - pad_w
            if abs(dj) >= W:
                continue
            start = ki * W + kj
            patch = x_ref[0, start:start + HW, :]
            contrib = jnp.dot(patch, w_ref[ki, kj, :, :],
                              preferred_element_type=jnp.float32)
            if dj != 0:
                valid = (wo_idx + dj >= 0) & (wo_idx + dj < W)
                contrib = jnp.where(valid, contrib, 0.0)
            acc = acc + contrib
    acc = acc + b_ref[...]
    if has_res:
        acc = acc + r_ref[0, :, :].astype(jnp.float32)
    o_ref[0, :, :] = acc.astype(o_ref.dtype)


@lru_cache(maxsize=None)
def _build_conv(B, H, W, Cin, Cout, kh, kw, has_res):
    pad_h, pad_w = kh // 2, kw // 2
    HW = H * W
    L = HW + 2 * (pad_h * W + pad_w)
    tn = _pick_n_tile(kh * kw * Cin, Cout)
    in_specs = [
        pl.BlockSpec((1, L, Cin), lambda b, j: (b, 0, 0)),
        pl.BlockSpec((kh, kw, Cin, tn), lambda b, j: (0, 0, 0, j)),
        pl.BlockSpec((1, tn), lambda b, j: (0, j)),
    ]
    if has_res:
        in_specs.append(pl.BlockSpec((1, HW, tn), lambda b, j: (b, 0, j)))
    kernel = partial(_conv_kernel, kh=kh, kw=kw, H=H, W=W, has_res=has_res)
    f = pl.pallas_call(
        kernel,
        out_shape=jax.ShapeDtypeStruct((B, HW, Cout), ACT_DTYPE),
        grid_spec=pltpu.PrefetchScalarGridSpec(
            num_scalar_prefetch=0,
            grid=(B, Cout // tn),
            in_specs=in_specs,
            out_specs=pl.BlockSpec((1, HW, tn), lambda b, j: (b, 0, j))),
        compiler_params=pltpu.CompilerParams(
            dimension_semantics=("parallel", "parallel"),
            vmem_limit_bytes=_VMEM_LIMIT))
    return jax.jit(f)


def _attn_kernel(q_ref, k_ref, v_ref, o_ref, *, scale, kv_len):
    """Fused per-head attention: scores, softmax (f32) and PV in one kernel."""
    q = q_ref[0, :, :]
    k = k_ref[0, :, :]
    v = v_ref[0, :, :]
    s = jax.lax.dot_general(q, k, (((1,), (1,)), ((), ())),
                            preferred_element_type=jnp.float32) * scale
    if kv_len < k.shape[0]:
        kmask = jax.lax.broadcasted_iota(jnp.int32, (1, k.shape[0]), 1) >= kv_len
        s = jnp.where(kmask, -1e30, s)
    m = jnp.max(s, axis=-1, keepdims=True)
    p = jnp.exp(s - m)
    denom = jnp.sum(p, axis=-1, keepdims=True)
    p = p * pl.reciprocal(denom, approx=True)
    o = jnp.dot(p.astype(v.dtype), v, preferred_element_type=jnp.float32)
    o_ref[0, :, :] = o.astype(o_ref.dtype)


@lru_cache(maxsize=None)
def _build_attention(G, Tq, Tk, dh, kv_len):
    kernel = partial(_attn_kernel, scale=1.0 / math.sqrt(dh), kv_len=kv_len)
    f = pl.pallas_call(
        kernel,
        out_shape=jax.ShapeDtypeStruct((G, Tq, dh), ACT_DTYPE),
        grid_spec=pltpu.PrefetchScalarGridSpec(
            num_scalar_prefetch=0,
            grid=(G,),
            in_specs=[pl.BlockSpec((1, Tq, dh), lambda g: (g, 0, 0)),
                      pl.BlockSpec((1, Tk, dh), lambda g: (g, 0, 0)),
                      pl.BlockSpec((1, Tk, dh), lambda g: (g, 0, 0))],
            out_specs=pl.BlockSpec((1, Tq, dh), lambda g: (g, 0, 0))),
        compiler_params=pltpu.CompilerParams(
            dimension_semantics=("parallel",),
            vmem_limit_bytes=_VMEM_LIMIT))
    return jax.jit(f)


def attention(q, k, v):
    """q: (G, Tq, dh), k/v: (G, Tk, dh) -> (G, Tq, dh).  No 128-padding of dh/Tk."""
    G, Tq, dh = q.shape
    Tk = k.shape[1]
    Tqp = _round_up(max(Tq, 8), 8)
    Tkp = _round_up(max(Tk, 8), 8)
    q = q.astype(ACT_DTYPE)
    k = k.astype(ACT_DTYPE)
    v = v.astype(ACT_DTYPE)
    if Tqp != Tq:
        q = jnp.pad(q, ((0, 0), (0, Tqp - Tq), (0, 0)))
    if Tkp != Tk:
        k = jnp.pad(k, ((0, 0), (0, Tkp - Tk), (0, 0)))
        v = jnp.pad(v, ((0, 0), (0, Tkp - Tk), (0, 0)))
    out = _build_attention(G, Tqp, Tkp, dh, Tk)(q, k, v)
    if Tqp != Tq:
        out = out[:, :Tq, :]
    return out


# ----------------------------------------------------------------------------
# NHWC layer primitives (norms / activations stay in plain JAX)
# ----------------------------------------------------------------------------
def conv2d_3x3(x, w, b, stride=1, residual=None):
    """3x3 conv, padding=1, NHWC; w is HWIO (3,3,Cin,Cout); bias fused in-kernel."""
    B, H, W, Cin = x.shape
    kh, kw, _, Cout = w.shape
    x = x.astype(ACT_DTYPE)
    if stride == 1 and H * W >= 8:
        pad_h, pad_w = kh // 2, kw // 2
        xf = x.reshape(B, H * W, Cin)
        xf = jnp.pad(xf, ((0, 0),
                          (pad_h * W + pad_w, pad_h * W + pad_w),
                          (0, 0)))
        args = [xf, w.astype(ACT_DTYPE), b.astype(jnp.float32)]
        if residual is not None:
            args.append(residual.astype(ACT_DTYPE).reshape(B, H * W, Cout))
        out = _build_conv(B, H, W, Cin, Cout, kh, kw, residual is not None)(*args)
        return out.reshape(B, H, W, Cout)
    # TODO(synk): strided / tiny-spatial convs fall back to JAX im2col + Pallas matmul.
    pad_h, pad_w = kh // 2, kw // 2
    xp = jnp.pad(x, ((0, 0), (pad_h, pad_h), (pad_w, pad_w), (0, 0)))
    Ho = (H + 2 * pad_h - kh) // stride + 1
    Wo = (W + 2 * pad_w - kw) // stride + 1
    cols = [xp[:, ki:ki + (Ho - 1) * stride + 1:stride,
               kj:kj + (Wo - 1) * stride + 1:stride, :]
            for ki in range(kh) for kj in range(kw)]
    patches = jnp.concatenate(cols, axis=-1).reshape(B * Ho * Wo, kh * kw * Cin)
    rflat = None if residual is None else residual.reshape(B * Ho * Wo, Cout)
    y = pmatmul(patches, w.reshape(kh * kw * Cin, Cout), bias=b, residual=rflat)
    return y.reshape(B, Ho, Wo, Cout)


def group_norm(x, weight, bias, num_groups=32, eps=1e-5, silu=False):
    """GroupNorm on NHWC (f32 statistics), optional fused SiLU."""
    B, H, W, C = x.shape
    xf = x.astype(jnp.float32).reshape(B, H * W, num_groups, C // num_groups)
    mean = xf.mean(axis=(1, 3), keepdims=True)
    var = xf.var(axis=(1, 3), keepdims=True)
    xf = (xf - mean) * jax.lax.rsqrt(var + eps)
    xf = xf.reshape(B, H, W, C) * weight + bias
    if silu:
        xf = xf * jax.nn.sigmoid(xf)
    return xf.astype(ACT_DTYPE)


def layer_norm(x, weight, bias, eps=1e-5):
    xf = x.astype(jnp.float32)
    mean = xf.mean(-1, keepdims=True)
    var = xf.var(-1, keepdims=True)
    return ((xf - mean) * jax.lax.rsqrt(var + eps) * weight + bias).astype(ACT_DTYPE)


def _to_heads(t, n_heads):
    B, T, C = t.shape
    dh = C // n_heads
    return jnp.transpose(t.reshape(B, T, n_heads, dh), (0, 2, 1, 3)).reshape(
        B * n_heads, T, dh)


def _from_heads(t, B, n_heads):
    _, T, dh = t.shape
    return jnp.transpose(t.reshape(B, n_heads, T, dh), (0, 2, 1, 3)).reshape(
        B, T, n_heads * dh)


# ----------------------------------------------------------------------------
# UNET blocks (all activations NHWC / token-major bf16)
# ----------------------------------------------------------------------------
def attention_block(x, context, p):
    B, H, W, C = x.shape
    T = H * W
    nh = p["n_heads"]
    res_long = x.reshape(B * T, C)

    h = group_norm(x, p["gn_w"], p["gn_b"], 32, eps=1e-6)
    h = pmatmul(h.reshape(B * T, C), p["conv_in"]["w"], bias=p["conv_in"]["b"])
    h = h.reshape(B, T, C)

    # self-attention (+ fused residual in the out-projection)
    r = h.reshape(B * T, C)
    hn = layer_norm(h, p["ln1_w"], p["ln1_b"]).reshape(B * T, C)
    q = _to_heads(pmatmul(hn, p["attn1"]["wq"]).reshape(B, T, C), nh)
    k = _to_heads(pmatmul(hn, p["attn1"]["wk"]).reshape(B, T, C), nh)
    v = _to_heads(pmatmul(hn, p["attn1"]["wv"]).reshape(B, T, C), nh)
    o = _from_heads(attention(q, k, v), B, nh).reshape(B * T, C)
    h = pmatmul(o, p["attn1"]["out"]["w"], bias=p["attn1"]["out"]["b"],
                residual=r).reshape(B, T, C)

    # cross-attention
    r = h.reshape(B * T, C)
    hn = layer_norm(h, p["ln2_w"], p["ln2_b"]).reshape(B * T, C)
    S = context.shape[1]
    ctx = context.reshape(B * S, context.shape[-1])
    q = _to_heads(pmatmul(hn, p["attn2"]["wq"]).reshape(B, T, C), nh)
    k = _to_heads(pmatmul(ctx, p["attn2"]["wk"]).reshape(B, S, C), nh)
    v = _to_heads(pmatmul(ctx, p["attn2"]["wv"]).reshape(B, S, C), nh)
    o = _from_heads(attention(q, k, v), B, nh).reshape(B * T, C)
    h = pmatmul(o, p["attn2"]["out"]["w"], bias=p["attn2"]["out"]["b"],
                residual=r).reshape(B, T, C)

    # GeGLU FFN (+ fused residual in the down-projection)
    r = h.reshape(B * T, C)
    hn = layer_norm(h, p["ln3_w"], p["ln3_b"]).reshape(B * T, C)
    a = pmatmul(hn, p["geglu1a"]["w"], bias=p["geglu1a"]["b"])
    g = pmatmul(hn, p["geglu1b"]["w"], bias=p["geglu1b"]["b"])
    # TODO(synk): exact-erf GELU gating stays in plain JAX (erf not lowered in the kernel).
    gated = (a.astype(jnp.float32) *
             jax.nn.gelu(g.astype(jnp.float32), approximate=False)).astype(ACT_DTYPE)
    h = pmatmul(gated, p["geglu2"]["w"], bias=p["geglu2"]["b"], residual=r)

    # 1x1 conv out with the long residual fused in the epilogue
    out = pmatmul(h, p["conv_out"]["w"], bias=p["conv_out"]["b"], residual=res_long)
    return out.reshape(B, H, W, C)


def residual_block(x, time, p):
    B, H, W, Cin = x.shape
    Cout = p["conv_f"]["w"].shape[-1]
    h = group_norm(x, p["gn_f_w"], p["gn_f_b"], 32, eps=1e-5, silu=True)

    # time embedding -> folded into conv_feature's bias (epilogue fusion)
    t = pmatmul(jax.nn.silu(time.astype(jnp.float32)),
                p["lin_t"]["w"], bias=p["lin_t"]["b"])          # (1, Cout)
    bias_total = p["conv_f"]["b"] + t.astype(jnp.float32)
    merged = conv2d_3x3(h, p["conv_f"]["w"], bias_total)

    merged = group_norm(merged, p["gn_m_w"], p["gn_m_b"], 32, eps=1e-5, silu=True)

    if p["res"] is not None:
        residue = pmatmul(x.reshape(B * H * W, Cin), p["res"]["w"],
                          bias=p["res"]["b"]).reshape(B, H, W, Cout)
    else:
        residue = x
    # final 3x3 conv with bias + residual fused in the kernel epilogue
    return conv2d_3x3(merged, p["conv_m"]["w"], p["conv_m"]["b"], residual=residue)


def apply_switch(layers, x, context, time):
    for layer in layers:
        tag, p = layer[0], layer[1]
        if tag == "attn":
            x = attention_block(x, context, p)
        elif tag == "res":
            x = residual_block(x, time, p)
        elif tag == "up":
            x = jnp.repeat(jnp.repeat(x, 2, axis=1), 2, axis=2)   # nearest, scale 2
            x = conv2d_3x3(x, p["w"], p["b"])
        elif tag == "conv_s1":
            x = conv2d_3x3(x, p["w"], p["b"])
        elif tag == "conv_s2":
            x = conv2d_3x3(x, p["w"], p["b"], stride=2)
        else:
            raise ValueError(tag)
    return x


def unet_forward(params, x_nchw, context, time):
    # NCHW -> NHWC once at the boundary; channels-last (lane-dense) internally.
    x = jnp.transpose(x_nchw, (0, 2, 3, 1)).astype(ACT_DTYPE)
    context = context.astype(ACT_DTYPE)
    skips = []
    for layers in params["encoders"]:
        x = apply_switch(layers, x, context, time)
        skips.append(x)
    x = apply_switch(params["bottleneck"], x, context, time)
    for layers in params["decoders"]:
        x = jnp.concatenate([x, skips.pop()], axis=-1)
        x = apply_switch(layers, x, context, time)
    return jnp.transpose(x, (0, 3, 1, 2)).astype(jnp.float32)


# ----------------------------------------------------------------------------
# Deterministic parameter init (weights bf16, biases/norm params f32)
# ----------------------------------------------------------------------------
class ParamGen:
    def __init__(self, key):
        self.key = key
        self.count = 0

    def _next(self):
        k = jax.random.fold_in(self.key, self.count)
        self.count += 1
        return k

    def uniform(self, shape, bound):
        return jax.random.uniform(self._next(), shape, jnp.float32, -bound, bound)


def _ones(n):
    return jnp.ones((n,), jnp.float32)


def _zeros(n):
    return jnp.zeros((n,), jnp.float32)


def init_conv3x3(pi, cin, cout):
    bound = 1.0 / math.sqrt(cin * 9)
    return dict(w=pi.uniform((3, 3, cin, cout), bound).astype(ACT_DTYPE),
                b=pi.uniform((1, cout), bound))


def init_linear(pi, cin, cout, bias=True):
    bound = 1.0 / math.sqrt(cin)
    d = dict(w=pi.uniform((cin, cout), bound).astype(ACT_DTYPE))
    d["b"] = pi.uniform((1, cout), bound) if bias else None
    return d


def init_res(pi, cin, cout, n_time=1280):
    return dict(
        gn_f_w=_ones(cin), gn_f_b=_zeros(cin),
        conv_f=init_conv3x3(pi, cin, cout),
        lin_t=init_linear(pi, n_time, cout, True),
        gn_m_w=_ones(cout), gn_m_b=_zeros(cout),
        conv_m=init_conv3x3(pi, cout, cout),
        res=(None if cin == cout else init_linear(pi, cin, cout, True)),
    )


def init_attn(pi, n_head, n_embd, d_context=768):
    C = n_head * n_embd
    return dict(
        n_heads=n_head,
        gn_w=_ones(C), gn_b=_zeros(C),
        conv_in=init_linear(pi, C, C, True),
        ln1_w=_ones(C), ln1_b=_zeros(C),
        attn1=dict(wq=init_linear(pi, C, C, False)["w"],
                   wk=init_linear(pi, C, C, False)["w"],
                   wv=init_linear(pi, C, C, False)["w"],
                   out=init_linear(pi, C, C, True)),
        ln2_w=_ones(C), ln2_b=_zeros(C),
        attn2=dict(wq=init_linear(pi, C, C, False)["w"],
                   wk=init_linear(pi, d_context, C, False)["w"],
                   wv=init_linear(pi, d_context, C, False)["w"],
                   out=init_linear(pi, C, C, True)),
        ln3_w=_ones(C), ln3_b=_zeros(C),
        geglu1a=init_linear(pi, C, 4 * C, True),
        geglu1b=init_linear(pi, C, 4 * C, True),
        geglu2=init_linear(pi, 4 * C, C, True),
        conv_out=init_linear(pi, C, C, True),
    )


def build_unet_params(key):
    pi = ParamGen(key)
    conv_s1 = lambda cin, cout: ("conv_s1", init_conv3x3(pi, cin, cout))
    conv_s2 = lambda cin, cout: ("conv_s2", init_conv3x3(pi, cin, cout))
    res = lambda cin, cout: ("res", init_res(pi, cin, cout))
    attn = lambda nh, ne: ("attn", init_attn(pi, nh, ne))
    up = lambda c: ("up", init_conv3x3(pi, c, c))

    encoders = [
        [conv_s1(4, 320)],
        [res(320, 320), attn(8, 40)],
        [res(320, 320), attn(8, 40)],
        [conv_s2(320, 320)],
        [res(320, 640), attn(8, 80)],
        [res(640, 640), attn(8, 80)],
        [conv_s2(640, 640)],
        [res(640, 1280), attn(8, 160)],
        [res(1280, 1280), attn(8, 160)],
        [conv_s2(1280, 1280)],
        [res(1280, 1280)],
        [res(1280, 1280)],
    ]
    bottleneck = [res(1280, 1280), attn(8, 160), res(1280, 1280)]
    decoders = [
        [res(2560, 1280)],
        [res(2560, 1280)],
        [res(2560, 1280), up(1280)],
        [res(2560, 1280), attn(8, 160)],
        [res(2560, 1280), attn(8, 160)],
        [res(1920, 1280), attn(8, 160), up(1280)],
        [res(1920, 640), attn(8, 80)],
        [res(1280, 640), attn(8, 80)],
        [res(960, 640), attn(8, 80), up(640)],
        [res(960, 320), attn(8, 40)],
        [res(640, 320), attn(8, 40)],
        [res(640, 320), attn(8, 40)],
    ]
    return dict(encoders=encoders, bottleneck=bottleneck, decoders=decoders)


# ----------------------------------------------------------------------------
# Main
# ----------------------------------------------------------------------------
if __name__ == "__main__":
    key = jax.random.PRNGKey(0)
    k_x, k_ctx, k_t, k_p = jax.random.split(key, 4)

    B, H, W = 1, 8, 8            # spatial must be divisible by 8 (3 downsamples)
    seq_len, d_context, n_time = 8, 768, 1280

    x = jax.random.normal(k_x, (B, 4, H, W), jnp.float32)
    context = jax.random.normal(k_ctx, (B, seq_len, d_context), jnp.float32)
    time = jax.random.normal(k_t, (1, n_time), jnp.float32)

    params = build_unet_params(k_p)

    out = unet_forward(params, x, context, time)
    out = jax.block_until_ready(out)

    assert out.shape == (B, 320, H, W), out.shape
    assert bool(jnp.all(jnp.isfinite(out)))
    print("KERNEL_OK")
</pallas_src>

<mosaic_0001>
module attributes {stable_mosaic.version = 11 : i64} {
  func.func @_conv_kernel(%arg0: i32, %arg1: i32, %arg2: memref<1x82x4xbf16, #tpu.memory_space<vmem>>, %arg3: memref<3x3x4x320xbf16, #tpu.memory_space<vmem>>, %arg4: memref<1x320xf32, #tpu.memory_space<vmem>>, %arg5: memref<1x64x320xbf16, #tpu.memory_space<vmem>>) attributes {dimension_semantics = [#tpu.dimension_semantics<parallel>, #tpu.dimension_semantics<parallel>], iteration_bounds = array<i64: 1, 1>, scalar_prefetch = 0 : i64, scratch_operands = 0 : i64, tpu.core_type = #tpu.core_type<tc>, window_params = [{transform_indices = @transform_0, window_bounds = array<i64: 1, 82, 4>}, {transform_indices = @transform_1, window_bounds = array<i64: 3, 3, 4, 320>}, {transform_indices = @transform_2, window_bounds = array<i64: 1, 320>}, {transform_indices = @transform_3, window_bounds = array<i64: 1, 64, 320>}]} {
    %0 = tpu.iota {dimensions = array<i32: 0>} : vector<64x1xi32>
    %c8_i32 = arith.constant 8 : i32
    %c0_i32 = arith.constant 0 : i32
    %1 = arith.cmpi eq, %c8_i32, %c0_i32 : i32
    %c1_i32 = arith.constant 1 : i32
    %2 = arith.select %1, %c1_i32, %c8_i32 : i32
    %3 = vector.broadcast %2 : i32 to vector<64x1xi32>
    %4 = arith.remsi %0, %3 : vector<64x1xi32>
    %c0_i32_0 = arith.constant 0 : i32
    %5 = vector.broadcast %c0_i32_0 : i32 to vector<64x1xi32>
    %6 = arith.cmpi ne, %4, %5 : vector<64x1xi32>
    %c0_i32_1 = arith.constant 0 : i32
    %7 = vector.broadcast %c0_i32_1 : i32 to vector<64x1xi32>
    %8 = arith.cmpi slt, %4, %7 : vector<64x1xi32>
    %c0_i32_2 = arith.constant 0 : i32
    %9 = arith.cmpi slt, %2, %c0_i32_2 : i32
    %10 = vector.broadcast %9 : i1 to vector<64x1xi1>
    %11 = vector.broadcast %10 : vector<64x1xi1> to vector<64x1xi1>
    %12 = arith.xori %8, %11 : vector<64x1xi1>
    %13 = arith.andi %12, %6 : vector<64x1xi1>
    %14 = vector.broadcast %2 : i32 to vector<64x1xi32>
    %15 = arith.addi %4, %14 : vector<64x1xi32>
    %16 = arith.select %13, %15, %4 : vector<64x1xi1>, vector<64x1xi32>
    %cst = arith.constant 0.000000e+00 : f32
    %17 = vector.broadcast %cst : f32 to vector<64x320xf32>
    %c0 = arith.constant 0 : index
    %c0_3 = arith.constant 0 : index
    %c0_4 = arith.constant 0 : index
    %18 = vector.load %arg2[%c0, %c0_3, %c0_4] : memref<1x82x4xbf16, #tpu.memory_space<vmem>>, vector<1x64x4xbf16>
    %19 = vector.shape_cast %18 : vector<1x64x4xbf16> to vector<64x4xbf16>
    %c0_5 = arith.constant 0 : index
    %c0_6 = arith.constant 0 : index
    %c0_7 = arith.constant 0 : index
    %c0_8 = arith.constant 0 : index
    %20 = vector.load %arg3[%c0_5, %c0_6, %c0_7, %c0_8] : memref<3x3x4x320xbf16, #tpu.memory_space<vmem>>, vector<1x1x4x320xbf16>
    %21 = vector.shape_cast %20 : vector<1x1x4x320xbf16> to vector<4x320xbf16>
    %cst_9 = arith.constant dense<0.000000e+00> : vector<64x320xf32>
    %22 = tpu.matmul %19, %21, %cst_9 {dimension_numbers = #tpu.dot_dimension_numbers<[1], [0], [0], [1], [0, 0, 1, 1], [], []>} : vector<64x4xbf16>, vector<4x320xbf16>, vector<64x320xf32> -> vector<64x320xf32>
    %c-1_i32 = arith.constant -1 : i32
    %23 = vector.broadcast %c-1_i32 : i32 to vector<64x1xi32>
    %24 = arith.addi %16, %23 : vector<64x1xi32>
    %c0_i32_10 = arith.constant 0 : i32
    %25 = vector.broadcast %c0_i32_10 : i32 to vector<64x1xi32>
    %26 = arith.cmpi sge, %24, %25 : vector<64x1xi32>
    %c-1_i32_11 = arith.constant -1 : i32
    %27 = vector.broadcast %c-1_i32_11 : i32 to vector<64x1xi32>
    %28 = arith.addi %16, %27 : vector<64x1xi32>
    %c8_i32_12 = arith.constant 8 : i32
    %29 = vector.broadcast %c8_i32_12 : i32 to vector<64x1xi32>
    %30 = arith.cmpi slt, %28, %29 : vector<64x1xi32>
    %31 = arith.andi %26, %30 : vector<64x1xi1>
    %cst_13 = arith.constant 0.000000e+00 : f32
    %32 = vector.shape_cast %31 : vector<64x1xi1> to vector<64x1xi1>
    %33 = vector.broadcast %32 : vector<64x1xi1> to vector<64x320xi1>
    %34 = vector.broadcast %cst_13 : f32 to vector<64x320xf32>
    %35 = arith.select %33, %22, %34 : vector<64x320xi1>, vector<64x320xf32>
    %36 = arith.addf %17, %35 : vector<64x320xf32>
    %c0_14 = arith.constant 0 : index
    %c1 = arith.constant 1 : index
    %c0_15 = arith.constant 0 : index
    %37 = vector.load %arg2[%c0_14, %c1, %c0_15] : memref<1x82x4xbf16, #tpu.memory_space<vmem>>, vector<1x64x4xbf16>
    %38 = vector.shape_cast %37 : vector<1x64x4xbf16> to vector<64x4xbf16>
    %c0_16 = arith.constant 0 : index
    %c1_17 = arith.constant 1 : index
    %c0_18 = arith.constant 0 : index
    %c0_19 = arith.constant 0 : index
    %39 = vector.load %arg3[%c0_16, %c1_17, %c0_18, %c0_19] : memref<3x3x4x320xbf16, #tpu.memory_space<vmem>>, vector<1x1x4x320xbf16>
    %40 = vector.shape_cast %39 : vector<1x1x4x320xbf16> to vector<4x320xbf16>
    %cst_20 = arith.constant dense<0.000000e+00> : vector<64x320xf32>
    %41 = tpu.matmul %38, %40, %cst_20 {dimension_numbers = #tpu.dot_dimension_numbers<[1], [0], [0], [1], [0, 0, 1, 1], [], []>} : vector<64x4xbf16>, vector<4x320xbf16>, vector<64x320xf32> -> vector<64x320xf32>
    %42 = arith.addf %36, %41 : vector<64x320xf32>
    %c0_21 = arith.constant 0 : index
    %c2 = arith.constant 2 : index
    %c0_22 = arith.constant 0 : index
    %43 = vector.load %arg2[%c0_21, %c2, %c0_22] : memref<1x82x4xbf16, #tpu.memory_space<vmem>>, vector<1x64x4xbf16>
    %44 = vector.shape_cast %43 : vector<1x64x4xbf16> to vector<64x4xbf16>
    %c0_23 = arith.constant 0 : index
    %c2_24 = arith.constant 2 : index
    %c0_25 = arith.constant 0 : index
    %c0_26 = arith.constant 0 : index
    %45 = vector.load %arg3[%c0_23, %c2_24, %c0_25, %c0_26] : memref<3x3x4x320xbf16, #tpu.memory_space<vmem>>, vector<1x1x4x320xbf16>
    %46 = vector.shape_cast %45 : vector<1x1x4x320xbf16> to vector<4x320xbf16>
    %cst_27 = arith.constant dense<0.000000e+00> : vector<64x320xf32>
    %47 = tpu.matmul %44, %46, %cst_27 {dimension_numbers = #tpu.dot_dimension_numbers<[1], [0], [0], [1], [0, 0, 1, 1], [], []>} : vector<64x4xbf16>, vector<4x320xbf16>, vector<64x320xf32> -> vector<64x320xf32>
    %c1_i32_28 = arith.constant 1 : i32
    %48 = vector.broadcast %c1_i32_28 : i32 to vector<64x1xi32>
    %49 = arith.addi %16, %48 : vector<64x1xi32>
    %c0_i32_29 = arith.constant 0 : i32
    %50 = vector.broadcast %c0_i32_29 : i32 to vector<64x1xi32>
    %51 = arith.cmpi sge, %49, %50 : vector<64x1xi32>
    %c1_i32_30 = arith.constant 1 : i32
    %52 = vector.broadcast %c1_i32_30 : i32 to vector<64x1xi32>
    %53 = arith.addi %16, %52 : vector<64x1xi32>
    %c8_i32_31 = arith.constant 8 : i32
    %54 = vector.broadcast %c8_i32_31 : i32 to vector<64x1xi32>
    %55 = arith.cmpi slt, %53, %54 : vector<64x1xi32>
    %56 = arith.andi %51, %55 : vector<64x1xi1>
    %cst_32 = arith.constant 0.000000e+00 : f32
    %57 = vector.shape_cast %56 : vector<64x1xi1> to vector<64x1xi1>
    %58 = vector.broadcast %57 : vector<64x1xi1> to vector<64x320xi1>
    %59 = vector.broadcast %cst_32 : f32 to vector<64x320xf32>
    %60 = arith.select %58, %47, %59 : vector<64x320xi1>, vector<64x320xf32>
    %61 = arith.addf %42, %60 : vector<64x320xf32>
    %c0_33 = arith.constant 0 : index
    %c8 = arith.constant 8 : index
    %c0_34 = arith.constant 0 : index
    %62 = vector.load %arg2[%c0_33, %c8, %c0_34] : memref<1x82x4xbf16, #tpu.memory_space<vmem>>, vector<1x64x4xbf16>
    %63 = vector.shape_cast %62 : vector<1x64x4xbf16> to vector<64x4xbf16>
    %c1_35 = arith.constant 1 : index
    %c0_36 = arith.constant 0 : index
    %c0_37 = arith.constant 0 : index
    %c0_38 = arith.constant 0 : index
    %64 = vector.load %arg3[%c1_35, %c0_36, %c0_37, %c0_38] : memref<3x3x4x320xbf16, #tpu.memory_space<vmem>>, vector<1x1x4x320xbf16>
    %65 = vector.shape_cast %64 : vector<1x1x4x320xbf16> to vector<4x320xbf16>
    %cst_39 = arith.constant dense<0.000000e+00> : vector<64x320xf32>
    %66 = tpu.matmul %63, %65, %cst_39 {dimension_numbers = #tpu.dot_dimension_numbers<[1], [0], [0], [1], [0, 0, 1, 1], [], []>} : vector<64x4xbf16>, vector<4x320xbf16>, vector<64x320xf32> -> vector<64x320xf32>
    %c-1_i32_40 = arith.constant -1 : i32
    %67 = vector.broadcast %c-1_i32_40 : i32 to vector<64x1xi32>
    %68 = arith.addi %16, %67 : vector<64x1xi32>
    %c0_i32_41 = arith.constant 0 : i32
    %69 = vector.broadcast %c0_i32_41 : i32 to vector<64x1xi32>
    %70 = arith.cmpi sge, %68, %69 : vector<64x1xi32>
    %c-1_i32_42 = arith.constant -1 : i32
    %71 = vector.broadcast %c-1_i32_42 : i32 to vector<64x1xi32>
    %72 = arith.addi %16, %71 : vector<64x1xi32>
    %c8_i32_43 = arith.constant 8 : i32
    %73 = vector.broadcast %c8_i32_43 : i32 to vector<64x1xi32>
    %74 = arith.cmpi slt, %72, %73 : vector<64x1xi32>
    %75 = arith.andi %70, %74 : vector<64x1xi1>
    %cst_44 = arith.constant 0.000000e+00 : f32
    %76 = vector.shape_cast %75 : vector<64x1xi1> to vector<64x1xi1>
    %77 = vector.broadcast %76 : vector<64x1xi1> to vector<64x320xi1>
    %78 = vector.broadcast %cst_44 : f32 to vector<64x320xf32>
    %79 = arith.select %77, %66, %78 : vector<64x320xi1>, vector<64x320xf32>
    %80 = arith.addf %61, %79 : vector<64x320xf32>
    %c0_45 = arith.constant 0 : index
    %c9 = arith.constant 9 : index
    %c0_46 = arith.constant 0 : index
    %81 = vector.load %arg2[%c0_45, %c9, %c0_46] : memref<1x82x4xbf16, #tpu.memory_space<vmem>>, vector<1x64x4xbf16>
    %82 = vector.shape_cast %81 : vector<1x64x4xbf16> to vector<64x4xbf16>
    %c1_47 = arith.constant 1 : index
    %c1_48 = arith.constant 1 : index
    %c0_49 = arith.constant 0 : index
    %c0_50 = arith.constant 0 : index
    %83 = vector.load %arg3[%c1_47, %c1_48, %c0_49, %c0_50] : memref<3x3x4x320xbf16, #tpu.memory_space<vmem>>, vector<1x1x4x320xbf16>
    %84 = vector.shape_cast %83 : vector<1x1x4x320xbf16> to vector<4x320xbf16>
    %cst_51 = arith.constant dense<0.000000e+00> : vector<64x320xf32>
    %85 = tpu.matmul %82, %84, %cst_51 {dimension_numbers = #tpu.dot_dimension_numbers<[1], [0], [0], [1], [0, 0, 1, 1], [], []>} : vector<64x4xbf16>, vector<4x320xbf16>, vector<64x320xf32> -> vector<64x320xf32>
    %86 = arith.addf %80, %85 : vector<64x320xf32>
    %c0_52 = arith.constant 0 : index
    %c10 = arith.constant 10 : index
    %c0_53 = arith.constant 0 : index
    %87 = vector.load %arg2[%c0_52, %c10, %c0_53] : memref<1x82x4xbf16, #tpu.memory_space<vmem>>, vector<1x64x4xbf16>
    %88 = vector.shape_cast %87 : vector<1x64x4xbf16> to vector<64x4xbf16>
    %c1_54 = arith.constant 1 : index
    %c2_55 = arith.constant 2 : index
    %c0_56 = arith.constant 0 : index
    %c0_57 = arith.constant 0 : index
    %89 = vector.load %arg3[%c1_54, %c2_55, %c0_56, %c0_57] : memref<3x3x4x320xbf16, #tpu.memory_space<vmem>>, vector<1x1x4x320xbf16>
    %90 = vector.shape_cast %89 : vector<1x1x4x320xbf16> to vector<4x320xbf16>
    %cst_58 = arith.constant dense<0.000000e+00> : vector<64x320xf32>
    %91 = tpu.matmul %88, %90, %cst_58 {dimension_numbers = #tpu.dot_dimension_numbers<[1], [0], [0], [1], [0, 0, 1, 1], [], []>} : vector<64x4xbf16>, vector<4x320xbf16>, vector<64x320xf32> -> vector<64x320xf32>
    %c1_i32_59 = arith.constant 1 : i32
    %92 = vector.broadcast %c1_i32_59 : i32 to vector<64x1xi32>
    %93 = arith.addi %16, %92 : vector<64x1xi32>
    %c0_i32_60 = arith.constant 0 : i32
    %94 = vector.broadcast %c0_i32_60 : i32 to vector<64x1xi32>
    %95 = arith.cmpi sge, %93, %94 : vector<64x1xi32>
    %c1_i32_61 = arith.constant 1 : i32
    %96 = vector.broadcast %c1_i32_61 : i32 to vector<64x1xi32>
    %97 = arith.addi %16, %96 : vector<64x1xi32>
    %c8_i32_62 = arith.constant 8 : i32
    %98 = vector.broadcast %c8_i32_62 : i32 to vector<64x1xi32>
    %99 = arith.cmpi slt, %97, %98 : vector<64x1xi32>
    %100 = arith.andi %95, %99 : vector<64x1xi1>
    %cst_63 = arith.constant 0.000000e+00 : f32
    %101 = vector.shape_cast %100 : vector<64x1xi1> to vector<64x1xi1>
    %102 = vector.broadcast %101 : vector<64x1xi1> to vector<64x320xi1>
    %103 = vector.broadcast %cst_63 : f32 to vector<64x320xf32>
    %104 = arith.select %102, %91, %103 : vector<64x320xi1>, vector<64x320xf32>
    %105 = arith.addf %86, %104 : vector<64x320xf32>
    %c0_64 = arith.constant 0 : index
    %c16 = arith.constant 16 : index
    %c0_65 = arith.constant 0 : index
    %106 = vector.load %arg2[%c0_64, %c16, %c0_65] : memref<1x82x4xbf16, #tpu.memory_space<vmem>>, vector<1x64x4xbf16>
    %107 = vector.shape_cast %106 : vector<1x64x4xbf16> to vector<64x4xbf16>
    %c2_66 = arith.constant 2 : index
    %c0_67 = arith.constant 0 : index
    %c0_68 = arith.constant 0 : index
    %c0_69 = arith.constant 0 : index
    %108 = vector.load %arg3[%c2_66, %c0_67, %c0_68, %c0_69] : memref<3x3x4x320xbf16, #tpu.memory_space<vmem>>, vector<1x1x4x320xbf16>
    %109 = vector.shape_cast %108 : vector<1x1x4x320xbf16> to vector<4x320xbf16>
    %cst_70 = arith.constant dense<0.000000e+00> : vector<64x320xf32>
    %110 = tpu.matmul %107, %109, %cst_70 {dimension_numbers = #tpu.dot_dimension_numbers<[1], [0], [0], [1], [0, 0, 1, 1], [], []>} : vector<64x4xbf16>, vector<4x320xbf16>, vector<64x320xf32> -> vector<64x320xf32>
    %c-1_i32_71 = arith.constant -1 : i32
    %111 = vector.broadcast %c-1_i32_71 : i32 to vector<64x1xi32>
    %112 = arith.addi %16, %111 : vector<64x1xi32>
    %c0_i32_72 = arith.constant 0 : i32
    %113 = vector.broadcast %c0_i32_72 : i32 to vector<64x1xi32>
    %114 = arith.cmpi sge, %112, %113 : vector<64x1xi32>
    %c-1_i32_73 = arith.constant -1 : i32
    %115 = vector.broadcast %c-1_i32_73 : i32 to vector<64x1xi32>
    %116 = arith.addi %16, %115 : vector<64x1xi32>
    %c8_i32_74 = arith.constant 8 : i32
    %117 = vector.broadcast %c8_i32_74 : i32 to vector<64x1xi32>
    %118 = arith.cmpi slt, %116, %117 : vector<64x1xi32>
    %119 = arith.andi %114, %118 : vector<64x1xi1>
    %cst_75 = arith.constant 0.000000e+00 : f32
    %120 = vector.shape_cast %119 : vector<64x1xi1> to vector<64x1xi1>
    %121 = vector.broadcast %120 : vector<64x1xi1> to vector<64x320xi1>
    %122 = vector.broadcast %cst_75 : f32 to vector<64x320xf32>
    %123 = arith.select %121, %110, %122 : vector<64x320xi1>, vector<64x320xf32>
    %124 = arith.addf %105, %123 : vector<64x320xf32>
    %c0_76 = arith.constant 0 : index
    %c17 = arith.constant 17 : index
    %c0_77 = arith.constant 0 : index
    %125 = vector.load %arg2[%c0_76, %c17, %c0_77] : memref<1x82x4xbf16, #tpu.memory_space<vmem>>, vector<1x64x4xbf16>
    %126 = vector.shape_cast %125 : vector<1x64x4xbf16> to vector<64x4xbf16>
    %c2_78 = arith.constant 2 : index
    %c1_79 = arith.constant 1 : index
    %c0_80 = arith.constant 0 : index
    %c0_81 = arith.constant 0 : index
    %127 = vector.load %arg3[%c2_78, %c1_79, %c0_80, %c0_81] : memref<3x3x4x320xbf16, #tpu.memory_space<vmem>>, vector<1x1x4x320xbf16>
    %128 = vector.shape_cast %127 : vector<1x1x4x320xbf16> to vector<4x320xbf16>
    %cst_82 = arith.constant dense<0.000000e+00> : vector<64x320xf32>
    %129 = tpu.matmul %126, %128, %cst_82 {dimension_numbers = #tpu.dot_dimension_numbers<[1], [0], [0], [1], [0, 0, 1, 1], [], []>} : vector<64x4xbf16>, vector<4x320xbf16>, vector<64x320xf32> -> vector<64x320xf32>
    %130 = arith.addf %124, %129 : vector<64x320xf32>
    %c0_83 = arith.constant 0 : index
    %c18 = arith.constant 18 : index
    %c0_84 = arith.constant 0 : index
    %131 = vector.load %arg2[%c0_83, %c18, %c0_84] : memref<1x82x4xbf16, #tpu.memory_space<vmem>>, vector<1x64x4xbf16>
    %132 = vector.shape_cast %131 : vector<1x64x4xbf16> to vector<64x4xbf16>
    %c2_85 = arith.constant 2 : index
    %c2_86 = arith.constant 2 : index
    %c0_87 = arith.constant 0 : index
    %c0_88 = arith.constant 0 : index
    %133 = vector.load %arg3[%c2_85, %c2_86, %c0_87, %c0_88] : memref<3x3x4x320xbf16, #tpu.memory_space<vmem>>, vector<1x1x4x320xbf16>
    %134 = vector.shape_cast %133 : vector<1x1x4x320xbf16> to vector<4x320xbf16>
    %cst_89 = arith.constant dense<0.000000e+00> : vector<64x320xf32>
    %135 = tpu.matmul %132, %134, %cst_89 {dimension_numbers = #tpu.dot_dimension_numbers<[1], [0], [0], [1], [0, 0, 1, 1], [], []>} : vector<64x4xbf16>, vector<4x320xbf16>, vector<64x320xf32> -> vector<64x320xf32>
    %c1_i32_90 = arith.constant 1 : i32
    %136 = vector.broadcast %c1_i32_90 : i32 to vector<64x1xi32>
    %137 = arith.addi %16, %136 : vector<64x1xi32>
    %c0_i32_91 = arith.constant 0 : i32
    %138 = vector.broadcast %c0_i32_91 : i32 to vector<64x1xi32>
    %139 = arith.cmpi sge, %137, %138 : vector<64x1xi32>
    %c1_i32_92 = arith.constant 1 : i32
    %140 = vector.broadcast %c1_i32_92 : i32 to vector<64x1xi32>
    %141 = arith.addi %16, %140 : vector<64x1xi32>
    %c8_i32_93 = arith.constant 8 : i32
    %142 = vector.broadcast %c8_i32_93 : i32 to vector<64x1xi32>
    %143 = arith.cmpi slt, %141, %142 : vector<64x1xi32>
    %144 = arith.andi %139, %143 : vector<64x1xi1>
    %cst_94 = arith.constant 0.000000e+00 : f32
    %145 = vector.shape_cast %144 : vector<64x1xi1> to vector<64x1xi1>
    %146 = vector.broadcast %145 : vector<64x1xi1> to vector<64x320xi1>
    %147 = vector.broadcast %cst_94 : f32 to vector<64x320xf32>
    %148 = arith.select %146, %135, %147 : vector<64x320xi1>, vector<64x320xf32>
    %149 = arith.addf %130, %148 : vector<64x320xf32>
    %c0_95 = arith.constant 0 : index
    %c0_96 = arith.constant 0 : index
    %150 = vector.load %arg4[%c0_95, %c0_96] : memref<1x320xf32, #tpu.memory_space<vmem>>, vector<1x320xf32>
    %151 = vector.broadcast %150 : vector<1x320xf32> to vector<64x320xf32>
    %152 = arith.addf %149, %151 : vector<64x320xf32>
    %153 = arith.truncf %152 : vector<64x320xf32> to vector<64x320xbf16>
    %c0_97 = arith.constant 0 : index
    %c0_98 = arith.constant 0 : index
    %c0_99 = arith.constant 0 : index
    %154 = vector.load %arg5[%c0_97, %c0_98, %c0_99] : memref<1x64x320xbf16, #tpu.memory_space<vmem>>, vector<1x64x320xbf16>
    %155 = vector.shape_cast %154 : vector<1x64x320xbf16> to vector<64x320xbf16>
    %156 = vector.shape_cast %153 : vector<64x320xbf16> to vector<1x64x320xbf16>
    tpu.vector_store %arg5[%c0_97, %c0_98, %c0_99], %156 {strides = array<i32>} : memref<1x64x320xbf16, #tpu.memory_space<vmem>>, vector<1x64x320xbf16>,
    return
  }
  func.func @transform_0(%arg0: i32, %arg1: i32) -> (i32, i32, i32) {
    %c0_i32 = arith.constant 0 : i32
    %c0_i32_0 = arith.constant 0 : i32
    %c0_i32_1 = arith.constant 0 : i32
    return %arg0, %c0_i32, %c0_i32_0 : i32, i32, i32
  }
  func.func @transform_1(%arg0: i32, %arg1: i32) -> (i32, i32, i32, i32) {
    %c0_i32 = arith.constant 0 : i32
    %c0_i32_0 = arith.constant 0 : i32
    %c0_i32_1 = arith.constant 0 : i32
    %c0_i32_2 = arith.constant 0 : i32
    return %c0_i32, %c0_i32_0, %c0_i32_1, %arg1 : i32, i32, i32, i32
  }
  func.func @transform_2(%arg0: i32, %arg1: i32) -> (i32, i32) {
    %c0_i32 = arith.constant 0 : i32
    %c0_i32_0 = arith.constant 0 : i32
    return %c0_i32, %arg1 : i32, i32
  }
  func.func @transform_3(%arg0: i32, %arg1: i32) -> (i32, i32, i32) {
    %c0_i32 = arith.constant 0 : i32
    %c0_i32_0 = arith.constant 0 : i32
    return %arg0, %c0_i32, %arg1 : i32, i32, i32
  }
}

</mosaic_0001>

<llo_original>
// kernel: tpu_custom_call.1
$region0: #{tpu_custom_call.1}
  #allocation0 [shape = 'u32[]', space=smem, size = 0x4, offset = 0x4, fixed_abs, tag = 'smem constant byte address 0x4 - core index']
  #allocation1 [shape = 'u32[144,128]{1,0:T(1,128)}', space=vmem, size = 0x12000, scoped, tag = 'internal scratch']
  %s0 = inlined_call_operand.vmem [shape: bf16[1,82,4], index: 0, kind: input, shape index: {}]
  %s1 = inlined_call_operand.hbm [shape: bf16[3,3,4,320], index: 1, kind: input, shape index: {}]
  %s2 = inlined_call_operand.vmem [shape: f32[1,320], index: 2, kind: input, shape index: {}]
  %s3 = inlined_call_operand.hbm [shape: bf16[1,64,320], index: 3, kind: output, shape index: {}]
  %s4 = sld [smem:[#allocation0]]
  $region26: #{tpu_custom_call.1} parent=0
    _
  %s6 = ssub.s32 1, %s4
  %s7 = scalar_select 0, %s6, %s4
  $region1: #{tpu_custom_call.1} parent=0
    #allocation2 [shape = 'u8[27648]{0}', space=vmem, size = 0x6c00, scoped, tag = 'input window, operand 1, single buffered']
    #allocation3 [shape = 's32[1]{0}', space=sflag, size = 0x4, scoped, tag = 'scoped memory for tpu_custom_call.1']
    #allocation4 [shape = 's32[1]{0}', space=sflag, size = 0x4, scoped, tag = 'scoped memory for tpu_custom_call.1']
    #allocation5 [shape = 'u8[49152]{0}', space=vmem, size = 0xc000, scoped, tag = 'output window, operand 0, single buffered']
    %8 = vsyncpa [#allocation3], 0
    %9 = vsyncpa [#allocation4], 0
    // Predicated region
    $region2: #{tpu_custom_call.1} parent=1 // pred_check
      _
    $region3: #{tpu_custom_call.1} parent=1 // pred_check_branch
      %11 = sbr.rel (0) target = $region5
    $region4: #{tpu_custom_call.1} parent=1 // pred_region
      _
    $region5: #{tpu_custom_call.1} parent=1 // pred_fallthru
      _
    // Predicated region
    $region6: #{tpu_custom_call.1} parent=1 // pred_check
      _
    $region7: #{tpu_custom_call.1} parent=1 // pred_check_branch
      %13 = sbr.rel (0) target = $region9
    $region8: #{tpu_custom_call.1} parent=1 // pred_region
      %s15 = ssub.s32 864, 864
      %16 = vsyncadd [#allocation3], %s15
      %s17 = sshll.u32 [#allocation2], 4
      %s18 = int_to_ptr.vmem [resolvable:$true] %s17
      %23 = dma.hbm_to_vmem [thread:$0]  %s1, 864, %s18, [#allocation3], 96, 96, 6
    $region9: #{tpu_custom_call.1} parent=1 // pred_fallthru
      _
    // Predicated region
    $region10: #{tpu_custom_call.1} parent=1 // pred_check
      _
    $region11: #{tpu_custom_call.1} parent=1 // pred_check_branch
      %25 = sbr.rel (0) target = $region13
    $region12: #{tpu_custom_call.1} parent=1 // pred_region
      _
    $region13: #{tpu_custom_call.1} parent=1 // pred_fallthru
      _
    // Predicated region
    $region14: #{tpu_custom_call.1} parent=1 // pred_check
      _
    $region15: #{tpu_custom_call.1} parent=1 // pred_check_branch
      %27 = sbr.rel (0) target = $region17
    $region16: #{tpu_custom_call.1} parent=1 // pred_region
      %28 = dma.done [#allocation3], 864
    $region17: #{tpu_custom_call.1} parent=1 // pred_fallthru
      _
    %v30 = vlaneseq
    %v31 = vshrl.u32 %v30, 7
    %v32 = vadd.s32 %v31, 8
    %v33 = vadd.s32 %v31, 16
    %v34 = vadd.s32 %v31, 24
    %v35 = vadd.s32 %v31, 32
    %v36 = vadd.s32 %v31, 40
    %v37 = vadd.s32 %v31, 48
    %v38 = vadd.s32 %v31, 56
    %vm39 = vcmp.lt.s32.totalorder %v31, 0
    %v40 = vsub.s32 0, %v31
    %v41 = vsel %vm39, %v40, %v31
    %v42 = vshrl.u32 %v41, 3
    %v43 = vand.u32 %v41, 7
    %v44 = vsub.s32 0, %v43
    %v45 = vsel %vm39, %v44, %v43
    %vm46 = vcmp.lt.s32.totalorder %v32, 0
    %v47 = vsub.s32 0, %v32
    %v48 = vsel %vm46, %v47, %v32
    %v49 = vshrl.u32 %v48, 3
    %v50 = vand.u32 %v48, 7
    %v51 = vsub.s32 0, %v50
    %v52 = vsel %vm46, %v51, %v50
    %vm53 = vcmp.lt.s32.totalorder %v33, 0
    %v54 = vsub.s32 0, %v33
    %v55 = vsel %vm53, %v54, %v33
    %v56 = vshrl.u32 %v55, 3
    %v57 = vand.u32 %v55, 7
    %v58 = vsub.s32 0, %v57
    %v59 = vsel %vm53, %v58, %v57
    %vm60 = vcmp.lt.s32.totalorder %v34, 0
    %v61 = vsub.s32 0, %v34
    %v62 = vsel %vm60, %v61, %v34
    %v63 = vshrl.u32 %v62, 3
    %v64 = vand.u32 %v62, 7
    %v65 = vsub.s32 0, %v64
    %v66 = vsel %vm60, %v65, %v64
    %vm67 = vcmp.lt.s32.totalorder %v35, 0
    %v68 = vsub.s32 0, %v35
    %v69 = vsel %vm67, %v68, %v35
    %v70 = vshrl.u32 %v69, 3
    %v71 = vand.u32 %v69, 7
    %v72 = vsub.s32 0, %v71
    %v73 = vsel %vm67, %v72, %v71
    %vm74 = vcmp.lt.s32.totalorder %v36, 0
    %v75 = vsub.s32 0, %v36
    %v76 = vsel %vm74, %v75, %v36
    %v77 = vshrl.u32 %v76, 3
    %v78 = vand.u32 %v76, 7
    %v79 = vsub.s32 0, %v78
    %v80 = vsel %vm74, %v79, %v78
    %vm81 = vcmp.lt.s32.totalorder %v37, 0
    %v82 = vsub.s32 0, %v37
    %v83 = vsel %vm81, %v82, %v37
    %v84 = vshrl.u32 %v83, 3
    %v85 = vand.u32 %v83, 7
    %v86 = vsub.s32 0, %v85
    %v87 = vsel %vm81, %v86, %v85
    %vm88 = vcmp.lt.s32.totalorder %v38, 0
    %v89 = vsub.s32 0, %v38
    %v90 = vsel %vm88, %v89, %v38
    %v91 = vshrl.u32 %v90, 3
    %v92 = vand.u32 %v90, 7
    %v93 = vsub.s32 0, %v92
    %v94 = vsel %vm88, %v93, %v92
    %vm95 = vcmp.ne.s32.totalorder %v45, 0
    %vm96 = vcmp.ne.s32.totalorder %v52, 0
    %vm97 = vcmp.ne.s32.totalorder %v59, 0
    %vm98 = vcmp.ne.s32.totalorder %v66, 0
    %vm99 = vcmp.ne.s32.totalorder %v73, 0
    %vm100 = vcmp.ne.s32.totalorder %v80, 0
    %vm101 = vcmp.ne.s32.totalorder %v87, 0
    %vm102 = vcmp.ne.s32.totalorder %v94, 0
    %vm103 = vcmp.lt.s32.totalorder %v45, 0
    %vm104 = vcmp.lt.s32.totalorder %v52, 0
    %vm105 = vcmp.lt.s32.totalorder %v59, 0
    %vm106 = vcmp.lt.s32.totalorder %v66, 0
    %vm107 = vcmp.lt.s32.totalorder %v73, 0
    %vm108 = vcmp.lt.s32.totalorder %v80, 0
    %vm109 = vcmp.lt.s32.totalorder %v87, 0
    %vm110 = vcmp.lt.s32.totalorder %v94, 0
    %vm111 = vmand %vm103, %vm95
    %vm112 = vmand %vm104, %vm96
    %vm113 = vmand %vm105, %vm97
    %vm114 = vmand %vm106, %vm98
    %vm115 = vmand %vm107, %vm99
    %vm116 = vmand %vm108, %vm100
    %vm117 = vmand %vm109, %vm101
    %vm118 = vmand %vm110, %vm102
    %v119 = vadd.s32 %v45, 8
    %v120 = vadd.s32 %v52, 8
    %v121 = vadd.s32 %v59, 8
    %v122 = vadd.s32 %v66, 8
    %v123 = vadd.s32 %v73, 8
    %v124 = vadd.s32 %v80, 8
    %v125 = vadd.s32 %v87, 8
    %v126 = vadd.s32 %v94, 8
    %v127 = vsel %vm111, %v119, %v45
    %v128 = vsel %vm112, %v120, %v52
    %v129 = vsel %vm113, %v121, %v59
    %v130 = vsel %vm114, %v122, %v66
    %v131 = vsel %vm115, %v123, %v73
    %v132 = vsel %vm116, %v124, %v80
    %v133 = vsel %vm117, %v125, %v87
    %v134 = vsel %vm118, %v126, %v94
    %v135 = vld [vmem:[%s0] sm:$0xf]
    %v136 = vld [vmem:[%s0 + $0x4] sm:$0xf]
    %v137 = vld [vmem:[%s0 + $0x8] sm:$0xf]
    %v138 = vld [vmem:[%s0 + $0xc] sm:$0xf]
    %v139 = vld [vmem:[%s0 + $0x10] sm:$0xf]
    %v140 = vld [vmem:[%s0 + $0x14] sm:$0xf]
    %v141 = vld [vmem:[%s0 + $0x18] sm:$0xf]
    %v142 = vld [vmem:[%s0 + $0x1c] sm:$0xf]
    %v143 = vld [vmem:[#allocation2] sm:$0x3f]
    %v152 = vunpack.c.l.b16 %v135
    %v153 = vunpack.c.l.b16 %v136
    %v154 = vunpack.c.l.b16 %v137
    %v155 = vunpack.c.l.b16 %v138
    %v156 = vunpack.c.l.b16 %v139
    %v157 = vunpack.c.l.b16 %v140
    %v158 = vunpack.c.l.b16 %v141
    %v159 = vunpack.c.l.b16 %v142
    %v160 = vpack.c.b16 %v153, %v152
    %v161 = vpack.c.b16 %v155, %v154
    %v162 = vpack.c.b16 %v157, %v156
    %v163 = vpack.c.b16 %v159, %v158
    %v165 = vcombine.high %v143, %v143
    %v167 = vunpack.c.l.s4 1983009808
    %v168 = vunpack.c.0.s8 %v167
    %v169 = vlaneseq
    %v170 = vshrl.u32 %v169, 7
    %v171 = vsub.s32 %v168, %v170
    %v172 = vrot.slane %v143, %v171
    %v174 = vunpack.c.l.s4 1983009808
    %v175 = vunpack.c.0.s8 %v174
    %v176 = vlaneseq
    %v177 = vshrl.u32 %v176, 7
    %v178 = vsub.s32 %v175, %v177
    %v179 = vrot.slane %v165, %v178
    %v180 = vcombine.high %v172, %v172
    %vm181 = vcmask 31744
    %v183 = vsel %vm181, %v160, 0
    %v186 = vsel %vm181, %v161, 0
    %v189 = vsel %vm181, %v162, 0
    %v192 = vsel %vm181, %v163, 0
    %vm194 = vcmask 1041408
    %v196 = vsel %vm194, %v172, 0
    %v199 = vsel %vm194, %v180, 0
    %v202 = vsel %vm194, %v179, 0
    %204 = vmatprep.subr.bf16.mxu0 %v199
    %205 = vmatpush1.bf16.msra.mxu0 %v196
    %206 = vmatprep.subr.bf16.mxu0 0
    %207 = vmatpush1.bf16.msra.mxu0 0
    %208 = vmatprep.subr.bf16.mxu0 0
    %209 = vmatpush1.bf16.msra.mxu0 0
    %210 = vmatprep.subr.bf16.mxu0 0
    %211 = vmatpush1.bf16.msra.mxu0 0
    %212 = vmatprep.subr.bf16.mxu0 0
    %213 = vmatpush1.bf16.msra.mxu0 0
    %214 = vmatprep.subr.bf16.mxu0 0
    %215 = vmatpush1.bf16.msra.mxu0 0
    %216 = vmatprep.subr.bf16.mxu0 0
    %217 = vmatpush1.bf16.msra.mxu0 0
    %218 = vmatprep.subr.bf16.mxu0 0
    %219 = vmatpush1.bf16.msra.mxu0 0
    %220 = vmatprep.subr.bf16.mxu0 0
    %221 = vmatpush1.bf16.msra.mxu0 0
    %222 = vmatprep.subr.bf16.mxu0 0
    %223 = vmatpush1.bf16.msra.mxu0 0
    %224 = vmatprep.subr.bf16.mxu0 0
    %225 = vmatpush1.bf16.msra.mxu0 0
    %226 = vmatprep.subr.bf16.mxu0 0
    %227 = vmatpush1.bf16.msra.mxu0 0
    %228 = vmatprep.subr.bf16.mxu0 0
    %229 = vmatpush1.bf16.msra.mxu0 0
    %230 = vmatprep.subr.bf16.mxu0 0
    %231 = vmatpush1.bf16.msra.mxu0 0
    %232 = vmatprep.subr.bf16.mxu0 0
    %233 = vmatpush1.bf16.msra.mxu0 0
    %234 = vmatprep.subr.bf16.mxu0 0
    %235 = vmatpush1.bf16.msra.mxu0 0
    %236 = vmatprep.mubr.bf16.mxu0 0
    %237 = vmatmul.mubr.bf16.gmra.mrb[0].mxu0 %v183
    %v238 = vpop.f32.mrb[0].mxu0
    %v239 = vadd.f32 0.0, %v238
    %v240 = vpop.f32.mrb[0].mxu0
    %v241 = vadd.f32 0.0, %v240
    %v242 = vpop.f32.mrb[0].mxu0
    %v243 = vadd.f32 0.0, %v242
    %v244 = vpop.f32.mrb[0].mxu0
    %v245 = vadd.f32 0.0, %v244
    %246 = vmatprep.mubr.bf16.mxu0 0
    %247 = vmatmul.mubr.bf16.gmra.mrb[0].mxu0 %v186
    %v248 = vpop.f32.mrb[0].mxu0
    %v249 = vadd.f32 0.0, %v248
    %v250 = vpop.f32.mrb[0].mxu0
    %v251 = vadd.f32 0.0, %v250
    %v252 = vpop.f32.mrb[0].mxu0
    %v253 = vadd.f32 0.0, %v252
    %v254 = vpop.f32.mrb[0].mxu0
    %v255 = vadd.f32 0.0, %v254
    %256 = vmatprep.mubr.bf16.mxu0 0
    %257 = vmatmul.mubr.bf16.gmra.mrb[0].mxu0 %v189
    %v258 = vpop.f32.mrb[0].mxu0
    %v259 = vadd.f32 0.0, %v258
    %v260 = vpop.f32.mrb[0].mxu0
    %v261 = vadd.f32 0.0, %v260
    %v262 = vpop.f32.mrb[0].mxu0
    %v263 = vadd.f32 0.0, %v262
    %v264 = vpop.f32.mrb[0].mxu0
    %v265 = vadd.f32 0.0, %v264
    %266 = vmatprep.mubr.bf16.mxu0 0
    %267 = vmatmul.mubr.bf16.gmra.mrb[0].mxu0 %v192
    %v268 = vpop.f32.mrb[0].mxu0
    %v269 = vadd.f32 0.0, %v268
    %v270 = vpop.f32.mrb[0].mxu0
    %v271 = vadd.f32 0.0, %v270
    %v272 = vpop.f32.mrb[0].mxu0
    %v273 = vadd.f32 0.0, %v272
    %v274 = vpop.f32.mrb[0].mxu0
    %v275 = vadd.f32 0.0, %v274
    %276 = vdwg.mxu0
    %277 = vmatprep.subr.bf16.mxu0 0
    %278 = vmatpush1.bf16.msra.mxu0 %v202
    %279 = vmatprep.subr.bf16.mxu0 0
    %280 = vmatpush1.bf16.msra.mxu0 0
    %281 = vmatprep.subr.bf16.mxu0 0
    %282 = vmatpush1.bf16.msra.mxu0 0
    %283 = vmatprep.subr.bf16.mxu0 0
    %284 = vmatpush1.bf16.msra.mxu0 0
    %285 = vmatprep.subr.bf16.mxu0 0
    %286 = vmatpush1.bf16.msra.mxu0 0
    %287 = vmatprep.subr.bf16.mxu0 0
    %288 = vmatpush1.bf16.msra.mxu0 0
    %289 = vmatprep.subr.bf16.mxu0 0
    %290 = vmatpush1.bf16.msra.mxu0 0
    %291 = vmatprep.subr.bf16.mxu0 0
    %292 = vmatpush1.bf16.msra.mxu0 0
    %293 = vmatprep.subr.bf16.mxu0 0
    %294 = vmatpush1.bf16.msra.mxu0 0
    %295 = vmatprep.subr.bf16.mxu0 0
    %296 = vmatpush1.bf16.msra.mxu0 0
    %297 = vmatprep.subr.bf16.mxu0 0
    %298 = vmatpush1.bf16.msra.mxu0 0
    %299 = vmatprep.subr.bf16.mxu0 0
    %300 = vmatpush1.bf16.msra.mxu0 0
    %301 = vmatprep.subr.bf16.mxu0 0
    %302 = vmatpush1.bf16.msra.mxu0 0
    %303 = vmatprep.subr.bf16.mxu0 0
    %304 = vmatpush1.bf16.msra.mxu0 0
    %305 = vmatprep.subr.bf16.mxu0 0
    %306 = vmatpush1.bf16.msra.mxu0 0
    %307 = vmatprep.subr.bf16.mxu0 0
    %308 = vmatpush1.bf16.msra.mxu0 0
    %309 = vmatprep.mubr.bf16.mxu0 0
    %310 = vmatmul.mubr.bf16.gmra.mrb[0].mxu0 %v183
    %v311 = vpop.f32.mrb[0].mxu0
    %v312 = vadd.f32 0.0, %v311
    %v313 = vpop.f32.mrb[0].mxu0
    %v314 = vpop.f32.mrb[0].mxu0
    %v315 = vadd.f32 0.0, %v314
    %v316 = vpop.f32.mrb[0].mxu0
    %317 = vmatprep.mubr.bf16.mxu0 0
    %318 = vmatmul.mubr.bf16.gmra.mrb[0].mxu0 %v186
    %v319 = vpop.f32.mrb[0].mxu0
    %v320 = vadd.f32 0.0, %v319
    %v321 = vpop.f32.mrb[0].mxu0
    %v322 = vpop.f32.mrb[0].mxu0
    %v323 = vadd.f32 0.0, %v322
    %v324 = vpop.f32.mrb[0].mxu0
    %325 = vmatprep.mubr.bf16.mxu0 0
    %326 = vmatmul.mubr.bf16.gmra.mrb[0].mxu0 %v189
    %v327 = vpop.f32.mrb[0].mxu0
    %v328 = vadd.f32 0.0, %v327
    %v329 = vpop.f32.mrb[0].mxu0
    %v330 = vpop.f32.mrb[0].mxu0
    %v331 = vadd.f32 0.0, %v330
    %v332 = vpop.f32.mrb[0].mxu0
    %333 = vmatprep.mubr.bf16.mxu0 0
    %334 = vmatmul.mubr.bf16.gmra.mrb[0].mxu0 %v192
    %v335 = vpop.f32.mrb[0].mxu0
    %v336 = vadd.f32 0.0, %v335
    %v337 = vpop.f32.mrb[0].mxu0
    %v338 = vpop.f32.mrb[0].mxu0
    %v339 = vadd.f32 0.0, %v338
    %v340 = vpop.f32.mrb[0].mxu0
    %341 = vdwg.mxu0
    %v342 = vadd.s32 %v127, 4294967295
    %v343 = vadd.s32 %v128, 4294967295
    %v344 = vadd.s32 %v129, 4294967295
    %v345 = vadd.s32 %v130, 4294967295
    %v346 = vadd.s32 %v131, 4294967295
    %v347 = vadd.s32 %v132, 4294967295
    %v348 = vadd.s32 %v133, 4294967295
    %v349 = vadd.s32 %v134, 4294967295
    %vm350 = vcmp.ge.s32.totalorder %v342, 0
    %vm351 = vcmp.ge.s32.totalorder %v343, 0
    %vm352 = vcmp.ge.s32.totalorder %v344, 0
    %vm353 = vcmp.ge.s32.totalorder %v345, 0
    %vm354 = vcmp.ge.s32.totalorder %v346, 0
    %vm355 = vcmp.ge.s32.totalorder %v347, 0
    %vm356 = vcmp.ge.s32.totalorder %v348, 0
    %vm357 = vcmp.ge.s32.totalorder %v349, 0
    %vm358 = vcmp.lt.s32.totalorder %v342, 8
    %vm359 = vcmp.lt.s32.totalorder %v343, 8
    %vm360 = vcmp.lt.s32.totalorder %v344, 8
    %vm361 = vcmp.lt.s32.totalorder %v345, 8
    %vm362 = vcmp.lt.s32.totalorder %v346, 8
    %vm363 = vcmp.lt.s32.totalorder %v347, 8
    %vm364 = vcmp.lt.s32.totalorder %v348, 8
    %vm365 = vcmp.lt.s32.totalorder %v349, 8
    %vm366 = vmand %vm350, %vm358
    %vm367 = vmand %vm351, %vm359
    %vm368 = vmand %vm352, %vm360
    %vm369 = vmand %vm353, %vm361
    %vm370 = vmand %vm354, %vm362
    %vm371 = vmand %vm355, %vm363
    %vm372 = vmand %vm356, %vm364
    %vm373 = vmand %vm357, %vm365
    %v374 = vsel %vm366, 1, 0
    %v375 = vsel %vm367, 1, 0
    %v376 = vsel %vm368, 1, 0
    %v377 = vsel %vm369, 1, 0
    %v378 = vsel %vm370, 1, 0
    %v379 = vsel %vm371, 1, 0
    %v380 = vsel %vm372, 1, 0
    %v381 = vsel %vm373, 1, 0
    %vm382 = vcmp.eq.s32.totalorder %v374, 1
    %vm383 = vcmp.eq.s32.totalorder %v375, 1
    %vm384 = vcmp.eq.s32.totalorder %v376, 1
    %vm385 = vcmp.eq.s32.totalorder %v377, 1
    %vm386 = vcmp.eq.s32.totalorder %v378, 1
    %vm387 = vcmp.eq.s32.totalorder %v379, 1
    %vm388 = vcmp.eq.s32.totalorder %v380, 1
    %vm389 = vcmp.eq.s32.totalorder %v381, 1
    %v390 = vsel %vm382, %v239, 0.0
    %v391 = vsel %vm382, %v241, 0.0
    %v392 = vsel %vm382, %v312, 0.0
    %v393 = vsel %vm383, %v243, 0.0
    %v394 = vsel %vm383, %v245, 0.0
    %v395 = vsel %vm383, %v315, 0.0
    %v396 = vsel %vm384, %v249, 0.0
    %v397 = vsel %vm384, %v251, 0.0
    %v398 = vsel %vm384, %v320, 0.0
    %v399 = vsel %vm385, %v253, 0.0
    %v400 = vsel %vm385, %v255, 0.0
    %v401 = vsel %vm385, %v323, 0.0
    %v402 = vsel %vm386, %v259, 0.0
    %v403 = vsel %vm386, %v261, 0.0
    %v404 = vsel %vm386, %v328, 0.0
    %v405 = vsel %vm387, %v263, 0.0
    %v406 = vsel %vm387, %v265, 0.0
    %v407 = vsel %vm387, %v331, 0.0
    %v408 = vsel %vm388, %v269, 0.0
    %v409 = vsel %vm388, %v271, 0.0
    %v410 = vsel %vm388, %v336, 0.0
    %v411 = vsel %vm389, %v273, 0.0
    %v412 = vsel %vm389, %v275, 0.0
    %v413 = vsel %vm389, %v339, 0.0
    %v414 = vadd.f32 %v390, 0.0
    %v415 = vadd.f32 %v391, 0.0
    %v416 = vadd.f32 %v392, 0.0
    %v417 = vadd.f32 %v393, 0.0
    %v418 = vadd.f32 %v394, 0.0
    %v419 = vadd.f32 %v395, 0.0
    %v420 = vadd.f32 %v396, 0.0
    %v421 = vadd.f32 %v397, 0.0
    %v422 = vadd.f32 %v398, 0.0
    %v423 = vadd.f32 %v399, 0.0
    %v424 = vadd.f32 %v400, 0.0
    %v425 = vadd.f32 %v401, 0.0
    %v426 = vadd.f32 %v402, 0.0
    %v427 = vadd.f32 %v403, 0.0
    %v428 = vadd.f32 %v404, 0.0
    %v429 = vadd.f32 %v405, 0.0
    %v430 = vadd.f32 %v406, 0.0
    %v431 = vadd.f32 %v407, 0.0
    %v432 = vadd.f32 %v408, 0.0
    %v433 = vadd.f32 %v409, 0.0
    %v434 = vadd.f32 %v410, 0.0
    %v435 = vadd.f32 %v411, 0.0
    %v436 = vadd.f32 %v412, 0.0
    %v437 = vadd.f32 %v413, 0.0
    %v438 = vld [vmem:[%s0] sm:$0xf]
    %v439 = vld [vmem:[%s0 + $0x4] sm:$0xf]
    %v440 = vld [vmem:[%s0 + $0x8] sm:$0xf]
    %v441 = vld [vmem:[%s0 + $0xc] sm:$0xf]
    %v442 = vld [vmem:[%s0 + $0x10] sm:$0xf]
    %v443 = vld [vmem:[%s0 + $0x14] sm:$0xf]
    %v444 = vld [vmem:[%s0 + $0x18] sm:$0xf]
    %v445 = vld [vmem:[%s0 + $0x1c] sm:$0xf]
    %v446 = vld [vmem:[%s0 + $0x20] sm:$0x1]
    %s447 = scalar_lea.vmem [#allocation2], 6
    %v448 = vld [vmem:[%s447] sm:$0x3f]
    %v458 = vunpack.c.l.b16 %v438
    %v459 = vunpack.c.l.b16 %v439
    %v460 = vunpack.c.l.b16 %v440
    %v461 = vunpack.c.l.b16 %v441
    %v462 = vunpack.c.l.b16 %v442
    %v463 = vunpack.c.l.b16 %v443
    %v464 = vunpack.c.l.b16 %v444
    %v465 = vunpack.c.l.b16 %v445
    %v466 = vunpack.c.l.b16 %v446
    %v467 = vpack.c.b16 %v459, %v458
    %v468 = vpack.c.b16 %v461, %v460
    %v469 = vpack.c.b16 %v463, %v462
    %v470 = vpack.c.b16 %v465, %v464
    %v471 = vpack.c.b16 %v466, %v466
    %vm472 = vsmask.f32 7424
    %v474 = vshrl.u32 %v467, 16
    %v476 = vshll.u32 %v467, 16
    %v478 = vrot.slane %v476, 1
    %v479 = vor.u32 %v474, %v478
    %v481 = vshll.u32 %v468, 16
    %v483 = vrot.slane %v481, 1
    %v484 = vsel %vm472, %v479, %v483
    %v485 = vshrl.u32 %v468, 16
    %v487 = vor.u32 %v485, %v483
    %v489 = vshll.u32 %v469, 16
    %v491 = vrot.slane %v489, 1
    %v492 = vsel %vm472, %v487, %v491
    %v493 = vshrl.u32 %v469, 16
    %v495 = vor.u32 %v493, %v491
    %v497 = vshll.u32 %v470, 16
    %v499 = vrot.slane %v497, 1
    %v500 = vsel %vm472, %v495, %v499
    %v501 = vshrl.u32 %v470, 16
    %v503 = vor.u32 %v501, %v499
    %v505 = vshll.u32 %v471, 16
    %v507 = vrot.slane %v505, 1
    %v508 = vsel %vm472, %v503, %v507
    %v510 = vcombine.high %v448, %v448
    %v512 = vunpack.c.l.s4 1983009808
    %v513 = vunpack.c.0.s8 %v512
    %v514 = vlaneseq
    %v515 = vshrl.u32 %v514, 7
    %v516 = vsub.s32 %v513, %v515
    %v517 = vrot.slane %v448, %v516
    %v519 = vunpack.c.l.s4 1983009808
    %v520 = vunpack.c.0.s8 %v519
    %v521 = vlaneseq
    %v522 = vshrl.u32 %v521, 7
    %v523 = vsub.s32 %v520, %v522
    %v524 = vrot.slane %v510, %v523
    %v525 = vcombine.high %v517, %v517
    %v527 = vsel %vm181, %v484, 0
    %v530 = vsel %vm181, %v492, 0
    %v533 = vsel %vm181, %v500, 0
    %v536 = vsel %vm181, %v508, 0
    %v539 = vsel %vm194, %v517, 0
    %v542 = vsel %vm194, %v525, 0
    %v545 = vsel %vm194, %v524, 0
    %547 = vmatprep.subr.bf16.mxu0 %v542
    %548 = vmatpush1.bf16.msra.mxu0 %v539
    %549 = vmatprep.subr.bf16.mxu0 0
    %550 = vmatpush1.bf16.msra.mxu0 0
    %551 = vmatprep.subr.bf16.mxu0 0
    %552 = vmatpush1.bf16.msra.mxu0 0
    %553 = vmatprep.subr.bf16.mxu0 0
    %554 = vmatpush1.bf16.msra.mxu0 0
    %555 = vmatprep.subr.bf16.mxu0 0
    %556 = vmatpush1.bf16.msra.mxu0 0
    %557 = vmatprep.subr.bf16.mxu0 0
    %558 = vmatpush1.bf16.msra.mxu0 0
    %559 = vmatprep.subr.bf16.mxu0 0
    %560 = vmatpush1.bf16.msra.mxu0 0
    %561 = vmatprep.subr.bf16.mxu0 0
    %562 = vmatpush1.bf16.msra.mxu0 0
    %563 = vmatprep.subr.bf16.mxu0 0
    %564 = vmatpush1.bf16.msra.mxu0 0
    %565 = vmatprep.subr.bf16.mxu0 0
    %566 = vmatpush1.bf16.msra.mxu0 0
    %567 = vmatprep.subr.bf16.mxu0 0
    %568 = vmatpush1.bf16.msra.mxu0 0
    %569 = vmatprep.subr.bf16.mxu0 0
    %570 = vmatpush1.bf16.msra.mxu0 0
    %571 = vmatprep.subr.bf16.mxu0 0
    %572 = vmatpush1.bf16.msra.mxu0 0
    %573 = vmatprep.subr.bf16.mxu0 0
    %574 = vmatpush1.bf16.msra.mxu0 0
    %575 = vmatprep.subr.bf16.mxu0 0
    %576 = vmatpush1.bf16.msra.mxu0 0
    %577 = vmatprep.subr.bf16.mxu0 0
    %578 = vmatpush1.bf16.msra.mxu0 0
    %579 = vmatprep.mubr.bf16.mxu0 0
    %580 = vmatmul.mubr.bf16.gmra.mrb[0].mxu0 %v527
    %v581 = vpop.f32.mrb[0].mxu0
    %v582 = vadd.f32 0.0, %v581
    %v583 = vpop.f32.mrb[0].mxu0
    %v584 = vadd.f32 0.0, %v583
    %v585 = vpop.f32.mrb[0].mxu0
    %v586 = vadd.f32 0.0, %v585
    %v587 = vpop.f32.mrb[0].mxu0
    %v588 = vadd.f32 0.0, %v587
    %589 = vmatprep.mubr.bf16.mxu0 0
    %590 = vmatmul.mubr.bf16.gmra.mrb[0].mxu0 %v530
    %v591 = vpop.f32.mrb[0].mxu0
    %v592 = vadd.f32 0.0, %v591
    %v593 = vpop.f32.mrb[0].mxu0
    %v594 = vadd.f32 0.0, %v593
    %v595 = vpop.f32.mrb[0].mxu0
    %v596 = vadd.f32 0.0, %v595
    %v597 = vpop.f32.mrb[0].mxu0
    %v598 = vadd.f32 0.0, %v597
    %599 = vmatprep.mubr.bf16.mxu0 0
    %600 = vmatmul.mubr.bf16.gmra.mrb[0].mxu0 %v533
    %v601 = vpop.f32.mrb[0].mxu0
    %v602 = vadd.f32 0.0, %v601
    %v603 = vpop.f32.mrb[0].mxu0
    %v604 = vadd.f32 0.0, %v603
    %v605 = vpop.f32.mrb[0].mxu0
    %v606 = vadd.f32 0.0, %v605
    %v607 = vpop.f32.mrb[0].mxu0
    %v608 = vadd.f32 0.0, %v607
    %609 = vmatprep.mubr.bf16.mxu0 0
    %610 = vmatmul.mubr.bf16.gmra.mrb[0].mxu0 %v536
    %v611 = vpop.f32.mrb[0].mxu0
    %v612 = vadd.f32 0.0, %v611
    %v613 = vpop.f32.mrb[0].mxu0
    %v614 = vadd.f32 0.0, %v613
    %v615 = vpop.f32.mrb[0].mxu0
    %v616 = vadd.f32 0.0, %v615
    %v617 = vpop.f32.mrb[0].mxu0
    %v618 = vadd.f32 0.0, %v617
    %619 = vdwg.mxu0
    %620 = vmatprep.subr.bf16.mxu0 0
    %621 = vmatpush1.bf16.msra.mxu0 %v545
    %622 = vmatprep.subr.bf16.mxu0 0
    %623 = vmatpush1.bf16.msra.mxu0 0
    %624 = vmatprep.subr.bf16.mxu0 0
    %625 = vmatpush1.bf16.msra.mxu0 0
    %626 = vmatprep.subr.bf16.mxu0 0
    %627 = vmatpush1.bf16.msra.mxu0 0
    %628 = vmatprep.subr.bf16.mxu0 0
    %629 = vmatpush1.bf16.msra.mxu0 0
    %630 = vmatprep.subr.bf16.mxu0 0
    %631 = vmatpush1.bf16.msra.mxu0 0
    %632 = vmatprep.subr.bf16.mxu0 0
    %633 = vmatpush1.bf16.msra.mxu0 0
    %634 = vmatprep.subr.bf16.mxu0 0
    %635 = vmatpush1.bf16.msra.mxu0 0
    %636 = vmatprep.subr.bf16.mxu0 0
    %637 = vmatpush1.bf16.msra.mxu0 0
    %638 = vmatprep.subr.bf16.mxu0 0
    %639 = vmatpush1.bf16.msra.mxu0 0
    %640 = vmatprep.subr.bf16.mxu0 0
    %641 = vmatpush1.bf16.msra.mxu0 0
    %642 = vmatprep.subr.bf16.mxu0 0
    %643 = vmatpush1.bf16.msra.mxu0 0
    %644 = vmatprep.subr.bf16.mxu0 0
    %645 = vmatpush1.bf16.msra.mxu0 0
    %646 = vmatprep.subr.bf16.mxu0 0
    %647 = vmatpush1.bf16.msra.mxu0 0
    %648 = vmatprep.subr.bf16.mxu0 0
    %649 = vmatpush1.bf16.msra.mxu0 0
    %650 = vmatprep.subr.bf16.mxu0 0
    %651 = vmatpush1.bf16.msra.mxu0 0
    %652 = vmatprep.mubr.bf16.mxu0 0
    %653 = vmatmul.mubr.bf16.gmra.mrb[0].mxu0 %v527
    %v654 = vpop.f32.mrb[0].mxu0
    %v655 = vadd.f32 0.0, %v654
    %v656 = vpop.f32.mrb[0].mxu0
    %v657 = vpop.f32.mrb[0].mxu0
    %v658 = vadd.f32 0.0, %v657
    %v659 = vpop.f32.mrb[0].mxu0
    %660 = vmatprep.mubr.bf16.mxu0 0
    %661 = vmatmul.mubr.bf16.gmra.mrb[0].mxu0 %v530
    %v662 = vpop.f32.mrb[0].mxu0
    %v663 = vadd.f32 0.0, %v662
    %v664 = vpop.f32.mrb[0].mxu0
    %v665 = vpop.f32.mrb[0].mxu0
    %v666 = vadd.f32 0.0, %v665
    %v667 = vpop.f32.mrb[0].mxu0
    %668 = vmatprep.mubr.bf16.mxu0 0
    %669 = vmatmul.mubr.bf16.gmra.mrb[0].mxu0 %v533
    %v670 = vpop.f32.mrb[0].mxu0
    %v671 = vadd.f32 0.0, %v670
    %v672 = vpop.f32.mrb[0].mxu0
    %v673 = vpop.f32.mrb[0].mxu0
    %v674 = vadd.f32 0.0, %v673
    %v675 = vpop.f32.mrb[0].mxu0
    %676 = vmatprep.mubr.bf16.mxu0 0
    %677 = vmatmul.mubr.bf16.gmra.mrb[0].mxu0 %v536
    %v678 = vpop.f32.mrb[0].mxu0
    %v679 = vadd.f32 0.0, %v678
    %v680 = vpop.f32.mrb[0].mxu0
    %v681 = vpop.f32.mrb[0].mxu0
    %v682 = vadd.f32 0.0, %v681
    %v683 = vpop.f32.mrb[0].mxu0
    %684 = vdwg.mxu0
    %v685 = vadd.f32 %v414, %v582
    %v686 = vadd.f32 %v415, %v584
    %v687 = vadd.f32 %v416, %v655
    %v688 = vadd.f32 %v417, %v586
    %v689 = vadd.f32 %v418, %v588
    %v690 = vadd.f32 %v419, %v658
    %v691 = vadd.f32 %v420, %v592
    %v692 = vadd.f32 %v421, %v594
    %v693 = vadd.f32 %v422, %v663
    %v694 = vadd.f32 %v423, %v596
    %v695 = vadd.f32 %v424, %v598
    %v696 = vadd.f32 %v425, %v666
    %v697 = vadd.f32 %v426, %v602
    %v698 = vadd.f32 %v427, %v604
    %v699 = vadd.f32 %v428, %v671
    %v700 = vadd.f32 %v429, %v606
    %v701 = vadd.f32 %v430, %v608
    %v702 = vadd.f32 %v431, %v674
    %v703 = vadd.f32 %v432, %v612
    %v704 = vadd.f32 %v433, %v614
    %v705 = vadd.f32 %v434, %v679
    %v706 = vadd.f32 %v435, %v616
    %v707 = vadd.f32 %v436, %v618
    %v708 = vadd.f32 %v437, %v682
    %v709 = vld [vmem:[%s0] sm:$0xe]
    %v710 = vld [vmem:[%s0 + $0x4] sm:$0xf]
    %v711 = vld [vmem:[%s0 + $0x8] sm:$0xf]
    %v712 = vld [vmem:[%s0 + $0xc] sm:$0xf]
    %v713 = vld [vmem:[%s0 + $0x10] sm:$0xf]
    %v714 = vld [vmem:[%s0 + $0x14] sm:$0xf]
    %v715 = vld [vmem:[%s0 + $0x18] sm:$0xf]
    %v716 = vld [vmem:[%s0 + $0x1c] sm:$0xf]
    %v717 = vld [vmem:[%s0 + $0x20] sm:$0x1]
    %s718 = scalar_lea.vmem [#allocation2], 12
    %v719 = vld [vmem:[%s718] sm:$0x3f]
    %v729 = vunpack.c.l.b16 %v709
    %v730 = vunpack.c.l.b16 %v710
    %v731 = vunpack.c.l.b16 %v711
    %v732 = vunpack.c.l.b16 %v712
    %v733 = vunpack.c.l.b16 %v713
    %v734 = vunpack.c.l.b16 %v714
    %v735 = vunpack.c.l.b16 %v715
    %v736 = vunpack.c.l.b16 %v716
    %v737 = vunpack.c.l.b16 %v717
    %v738 = vpack.c.b16 %v730, %v729
    %v739 = vpack.c.b16 %v732, %v731
    %v740 = vpack.c.b16 %v734, %v733
    %v741 = vpack.c.b16 %v736, %v735
    %v742 = vpack.c.b16 %v737, %v737
    %vm743 = vcmask 1046528
    %v744 = vrot.slane %v738, 1
    %v745 = vrot.slane %v739, 1
    %v746 = vsel %vm743, %v744, %v745
    %v747 = vrot.slane %v740, 1
    %v748 = vsel %vm743, %v745, %v747
    %v749 = vrot.slane %v741, 1
    %v750 = vsel %vm743, %v747, %v749
    %v751 = vrot.slane %v742, 1
    %v752 = vsel %vm743, %v749, %v751
    %v754 = vcombine.high %v719, %v719
    %v756 = vunpack.c.l.s4 1983009808
    %v757 = vunpack.c.0.s8 %v756
    %v758 = vlaneseq
    %v759 = vshrl.u32 %v758, 7
    %v760 = vsub.s32 %v757, %v759
    %v761 = vrot.slane %v719, %v760
    %v763 = vunpack.c.l.s4 1983009808
    %v764 = vunpack.c.0.s8 %v763
    %v765 = vlaneseq
    %v766 = vshrl.u32 %v765, 7
    %v767 = vsub.s32 %v764, %v766
    %v768 = vrot.slane %v754, %v767
    %v769 = vcombine.high %v761, %v761
    %v771 = vsel %vm181, %v746, 0
    %v774 = vsel %vm181, %v748, 0
    %v777 = vsel %vm181, %v750, 0
    %v780 = vsel %vm181, %v752, 0
    %v783 = vsel %vm194, %v761, 0
    %v786 = vsel %vm194, %v769, 0
    %v789 = vsel %vm194, %v768, 0
    %791 = vmatprep.subr.bf16.mxu0 %v786
    %792 = vmatpush1.bf16.msra.mxu0 %v783
    %793 = vmatprep.subr.bf16.mxu0 0
    %794 = vmatpush1.bf16.msra.mxu0 0
    %795 = vmatprep.subr.bf16.mxu0 0
    %796 = vmatpush1.bf16.msra.mxu0 0
    %797 = vmatprep.subr.bf16.mxu0 0
    %798 = vmatpush1.bf16.msra.mxu0 0
    %799 = vmatprep.subr.bf16.mxu0 0
    %800 = vmatpush1.bf16.msra.mxu0 0
    %801 = vmatprep.subr.bf16.mxu0 0
    %802 = vmatpush1.bf16.msra.mxu0 0
    %803 = vmatprep.subr.bf16.mxu0 0
    %804 = vmatpush1.bf16.msra.mxu0 0
    %805 = vmatprep.subr.bf16.mxu0 0
    %806 = vmatpush1.bf16.msra.mxu0 0
    %807 = vmatprep.subr.bf16.mxu0 0
    %808 = vmatpush1.bf16.msra.mxu0 0
    %809 = vmatprep.subr.bf16.mxu0 0
    %810 = vmatpush1.bf16.msra.mxu0 0
    %811 = vmatprep.subr.bf16.mxu0 0
    %812 = vmatpush1.bf16.msra.mxu0 0
    %813 = vmatprep.subr.bf16.mxu0 0
    %814 = vmatpush1.bf16.msra.mxu0 0
    %815 = vmatprep.subr.bf16.mxu0 0
    %816 = vmatpush1.bf16.msra.mxu0 0
    %817 = vmatprep.subr.bf16.mxu0 0
    %818 = vmatpush1.bf16.msra.mxu0 0
    %819 = vmatprep.subr.bf16.mxu0 0
    %820 = vmatpush1.bf16.msra.mxu0 0
    %821 = vmatprep.subr.bf16.mxu0 0
    %822 = vmatpush1.bf16.msra.mxu0 0
    %823 = vmatprep.mubr.bf16.mxu0 0
    %824 = vmatmul.mubr.bf16.gmra.mrb[0].mxu0 %v771
    %v825 = vpop.f32.mrb[0].mxu0
    %v826 = vadd.f32 0.0, %v825
    %v827 = vpop.f32.mrb[0].mxu0
    %v828 = vadd.f32 0.0, %v827
    %v829 = vpop.f32.mrb[0].mxu0
    %v830 = vadd.f32 0.0, %v829
    %v831 = vpop.f32.mrb[0].mxu0
    %v832 = vadd.f32 0.0, %v831
    %833 = vmatprep.mubr.bf16.mxu0 0
    %834 = vmatmul.mubr.bf16.gmra.mrb[0].mxu0 %v774
    %v835 = vpop.f32.mrb[0].mxu0
    %v836 = vadd.f32 0.0, %v835
    %v837 = vpop.f32.mrb[0].mxu0
    %v838 = vadd.f32 0.0, %v837
    %v839 = vpop.f32.mrb[0].mxu0
    %v840 = vadd.f32 0.0, %v839
    %v841 = vpop.f32.mrb[0].mxu0
    %v842 = vadd.f32 0.0, %v841
    %843 = vmatprep.mubr.bf16.mxu0 0
    %844 = vmatmul.mubr.bf16.gmra.mrb[0].mxu0 %v777
    %v845 = vpop.f32.mrb[0].mxu0
    %v846 = vadd.f32 0.0, %v845
    %v847 = vpop.f32.mrb[0].mxu0
    %v848 = vadd.f32 0.0, %v847
    %v849 = vpop.f32.mrb[0].mxu0
    %v850 = vadd.f32 0.0, %v849
    %v851 = vpop.f32.mrb[0].mxu0
    %v852 = vadd.f32 0.0, %v851
    %853 = vmatprep.mubr.bf16.mxu0 0
    %854 = vmatmul.mubr.bf16.gmra.mrb[0].mxu0 %v780
    %v855 = vpop.f32.mrb[0].mxu0
    %v856 = vadd.f32 0.0, %v855
    %v857 = vpop.f32.mrb[0].mxu0
    %v858 = vadd.f32 0.0, %v857
    %v859 = vpop.f32.mrb[0].mxu0
    %v860 = vadd.f32 0.0, %v859
    %v861 = vpop.f32.mrb[0].mxu0
    %v862 = vadd.f32 0.0, %v861
    %863 = vdwg.mxu0
    %864 = vmatprep.subr.bf16.mxu0 0
    %865 = vmatpush1.bf16.msra.mxu0 %v789
    %866 = vmatprep.subr.bf16.mxu0 0
    %867 = vmatpush1.bf16.msra.mxu0 0
    %868 = vmatprep.subr.bf16.mxu0 0
    %869 = vmatpush1.bf16.msra.mxu0 0
    %870 = vmatprep.subr.bf16.mxu0 0
    %871 = vmatpush1.bf16.msra.mxu0 0
    %872 = vmatprep.subr.bf16.mxu0 0
    %873 = vmatpush1.bf16.msra.mxu0 0
    %874 = vmatprep.subr.bf16.mxu0 0
    %875 = vmatpush1.bf16.msra.mxu0 0
    %876 = vmatprep.subr.bf16.mxu0 0
    %877 = vmatpush1.bf16.msra.mxu0 0
    %878 = vmatprep.subr.bf16.mxu0 0
    %879 = vmatpush1.bf16.msra.mxu0 0
    %880 = vmatprep.subr.bf16.mxu0 0
    %881 = vmatpush1.bf16.msra.mxu0 0
    %882 = vmatprep.subr.bf16.mxu0 0
    %883 = vmatpush1.bf16.msra.mxu0 0
    %884 = vmatprep.subr.bf16.mxu0 0
    %885 = vmatpush1.bf16.msra.mxu0 0
    %886 = vmatprep.subr.bf16.mxu0 0
    %887 = vmatpush1.bf16.msra.mxu0 0
    %888 = vmatprep.subr.bf16.mxu0 0
    %889 = vmatpush1.bf16.msra.mxu0 0
    %890 = vmatprep.subr.bf16.mxu0 0
    %891 = vmatpush1.bf16.msra.mxu0 0
    %892 = vmatprep.subr.bf16.mxu0 0
    %893 = vmatpush1.bf16.msra.mxu0 0
    %894 = vmatprep.subr.bf16.mxu0 0
    %895 = vmatpush1.bf16.msra.mxu0 0
    %896 = vmatprep.mubr.bf16.mxu0 0
    %897 = vmatmul.mubr.bf16.gmra.mrb[0].mxu0 %v771
    %v898 = vpop.f32.mrb[0].mxu0
    %v899 = vadd.f32 0.0, %v898
    %v900 = vpop.f32.mrb[0].mxu0
    %v901 = vpop.f32.mrb[0].mxu0
    %v902 = vadd.f32 0.0, %v901
    %v903 = vpop.f32.mrb[0].mxu0
    %904 = vmatprep.mubr.bf16.mxu0 0
    %905 = vmatmul.mubr.bf16.gmra.mrb[0].mxu0 %v774
    %v906 = vpop.f32.mrb[0].mxu0
    %v907 = vadd.f32 0.0, %v906
    %v908 = vpop.f32.mrb[0].mxu0
    %v909 = vpop.f32.mrb[0].mxu0
    %v910 = vadd.f32 0.0, %v909
    %v911 = vpop.f32.mrb[0].mxu0
    %912 = vmatprep.mubr.bf16.mxu0 0
    %913 = vmatmul.mubr.bf16.gmra.mrb[0].mxu0 %v777
    %v914 = vpop.f32.mrb[0].mxu0
    %v915 = vadd.f32 0.0, %v914
    %v916 = vpop.f32.mrb[0].mxu0
    %v917 = vpop.f32.mrb[0].mxu0
    %v918 = vadd.f32 0.0, %v917
    %v919 = vpop.f32.mrb[0].mxu0
    %920 = vmatprep.mubr.bf16.mxu0 0
    %921 = vmatmul.mubr.bf16.gmra.mrb[0].mxu0 %v780
    %v922 = vpop.f32.mrb[0].mxu0
    %v923 = vadd.f32 0.0, %v922
    %v924 = vpop.f32.mrb[0].mxu0
    %v925 = vpop.f32.mrb[0].mxu0
    %v926 = vadd.f32 0.0, %v925
    %v927 = vpop.f32.mrb[0].mxu0
    %928 = vdwg.mxu0
    %v929 = vadd.s32 %v127, 1
    %v930 = vadd.s32 %v128, 1
    %v931 = vadd.s32 %v129, 1
    %v932 = vadd.s32 %v130, 1
    %v933 = vadd.s32 %v131, 1
    %v934 = vadd.s32 %v132, 1
    %v935 = vadd.s32 %v133, 1
    %v936 = vadd.s32 %v134, 1
    %vm937 = vcmp.ge.s32.totalorder %v929, 0
    %vm938 = vcmp.ge.s32.totalorder %v930, 0
    %vm939 = vcmp.ge.s32.totalorder %v931, 0
    %vm940 = vcmp.ge.s32.totalorder %v932, 0
    %vm941 = vcmp.ge.s32.totalorder %v933, 0
    %vm942 = vcmp.ge.s32.totalorder %v934, 0
    %vm943 = vcmp.ge.s32.totalorder %v935, 0
    %vm944 = vcmp.ge.s32.totalorder %v936, 0
    %vm945 = vcmp.lt.s32.totalorder %v929, 8
    %vm946 = vcmp.lt.s32.totalorder %v930, 8
    %vm947 = vcmp.lt.s32.totalorder %v931, 8
    %vm948 = vcmp.lt.s32.totalorder %v932, 8
    %vm949 = vcmp.lt.s32.totalorder %v933, 8
    %vm950 = vcmp.lt.s32.totalorder %v934, 8
    %vm951 = vcmp.lt.s32.totalorder %v935, 8
    %vm952 = vcmp.lt.s32.totalorder %v936, 8
    %vm953 = vmand %vm937, %vm945
    %vm954 = vmand %vm938, %vm946
    %vm955 = vmand %vm939, %vm947
    %vm956 = vmand %vm940, %vm948
    %vm957 = vmand %vm941, %vm949
    %vm958 = vmand %vm942, %vm950
    %vm959 = vmand %vm943, %vm951
    %vm960 = vmand %vm944, %vm952
    %v961 = vsel %vm953, 1, 0
    %v962 = vsel %vm954, 1, 0
    %v963 = vsel %vm955, 1, 0
    %v964 = vsel %vm956, 1, 0
    %v965 = vsel %vm957, 1, 0
    %v966 = vsel %vm958, 1, 0
    %v967 = vsel %vm959, 1, 0
    %v968 = vsel %vm960, 1, 0
    %vm969 = vcmp.eq.s32.totalorder %v961, 1
    %vm970 = vcmp.eq.s32.totalorder %v962, 1
    %vm971 = vcmp.eq.s32.totalorder %v963, 1
    %vm972 = vcmp.eq.s32.totalorder %v964, 1
    %vm973 = vcmp.eq.s32.totalorder %v965, 1
    %vm974 = vcmp.eq.s32.totalorder %v966, 1
    %vm975 = vcmp.eq.s32.totalorder %v967, 1
    %vm976 = vcmp.eq.s32.totalorder %v968, 1
    %v977 = vsel %vm969, %v826, 0.0
    %v978 = vsel %vm969, %v828, 0.0
    %v979 = vsel %vm969, %v899, 0.0
    %v980 = vsel %vm970, %v830, 0.0
    %v981 = vsel %vm970, %v832, 0.0
    %v982 = vsel %vm970, %v902, 0.0
    %v983 = vsel %vm971, %v836, 0.0
    %v984 = vsel %vm971, %v838, 0.0
    %v985 = vsel %vm971, %v907, 0.0
    %v986 = vsel %vm972, %v840, 0.0
    %v987 = vsel %vm972, %v842, 0.0
    %v988 = vsel %vm972, %v910, 0.0
    %v989 = vsel %vm973, %v846, 0.0
    %v990 = vsel %vm973, %v848, 0.0
    %v991 = vsel %vm973, %v915, 0.0
    %v992 = vsel %vm974, %v850, 0.0
    %v993 = vsel %vm974, %v852, 0.0
    %v994 = vsel %vm974, %v918, 0.0
    %v995 = vsel %vm975, %v856, 0.0
    %v996 = vsel %vm975, %v858, 0.0
    %v997 = vsel %vm975, %v923, 0.0
    %v998 = vsel %vm976, %v860, 0.0
    %v999 = vsel %vm976, %v862, 0.0
    %v1000 = vsel %vm976, %v926, 0.0
    %v1001 = vadd.f32 %v685, %v977
    %v1002 = vadd.f32 %v686, %v978
    %v1003 = vadd.f32 %v687, %v979
    %v1004 = vadd.f32 %v688, %v980
    %v1005 = vadd.f32 %v689, %v981
    %v1006 = vadd.f32 %v690, %v982
    %v1007 = vadd.f32 %v691, %v983
    %v1008 = vadd.f32 %v692, %v984
    %v1009 = vadd.f32 %v693, %v985
    %v1010 = vadd.f32 %v694, %v986
    %v1011 = vadd.f32 %v695, %v987
    %v1012 = vadd.f32 %v696, %v988
    %v1013 = vadd.f32 %v697, %v989
    %v1014 = vadd.f32 %v698, %v990
    %v1015 = vadd.f32 %v699, %v991
    %v1016 = vadd.f32 %v700, %v992
    %v1017 = vadd.f32 %v701, %v993
    %v1018 = vadd.f32 %v702, %v994
    %v1019 = vadd.f32 %v703, %v995
    %v1020 = vadd.f32 %v704, %v996
    %v1021 = vadd.f32 %v705, %v997
    %v1022 = vadd.f32 %v706, %v998
    %v1023 = vadd.f32 %v707, %v999
    %v1024 = vadd.f32 %v708, %v1000
    %v1025 = vld [vmem:[%s0 + $0x4] sm:$0xf]
    %v1026 = vld [vmem:[%s0 + $0x8] sm:$0xf]
    %v1027 = vld [vmem:[%s0 + $0xc] sm:$0xf]
    %v1028 = vld [vmem:[%s0 + $0x10] sm:$0xf]
    %v1029 = vld [vmem:[%s0 + $0x14] sm:$0xf]
    %v1030 = vld [vmem:[%s0 + $0x18] sm:$0xf]
    %v1031 = vld [vmem:[%s0 + $0x1c] sm:$0xf]
    %v1032 = vld [vmem:[%s0 + $0x20] sm:$0xf]
    %s1033 = scalar_lea.vmem [#allocation2], 18
    %v1034 = vld [vmem:[%s1033] sm:$0x3f]
    %v1043 = vunpack.c.l.b16 %v1025
    %v1044 = vunpack.c.l.b16 %v1026
    %v1045 = vunpack.c.l.b16 %v1027
    %v1046 = vunpack.c.l.b16 %v1028
    %v1047 = vunpack.c.l.b16 %v1029
    %v1048 = vunpack.c.l.b16 %v1030
    %v1049 = vunpack.c.l.b16 %v1031
    %v1050 = vunpack.c.l.b16 %v1032
    %v1051 = vpack.c.b16 %v1044, %v1043
    %v1052 = vpack.c.b16 %v1046, %v1045
    %v1053 = vpack.c.b16 %v1048, %v1047
    %v1054 = vpack.c.b16 %v1050, %v1049
    %v1056 = vcombine.high %v1034, %v1034
    %v1058 = vunpack.c.l.s4 1983009808
    %v1059 = vunpack.c.0.s8 %v1058
    %v1060 = vlaneseq
    %v1061 = vshrl.u32 %v1060, 7
    %v1062 = vsub.s32 %v1059, %v1061
    %v1063 = vrot.slane %v1034, %v1062
    %v1065 = vunpack.c.l.s4 1983009808
    %v1066 = vunpack.c.0.s8 %v1065
    %v1067 = vlaneseq
    %v1068 = vshrl.u32 %v1067, 7
    %v1069 = vsub.s32 %v1066, %v1068
    %v1070 = vrot.slane %v1056, %v1069
    %v1071 = vcombine.high %v1063, %v1063
    %v1073 = vsel %vm181, %v1051, 0
    %v1076 = vsel %vm181, %v1052, 0
    %v1079 = vsel %vm181, %v1053, 0
    %v1082 = vsel %vm181, %v1054, 0
    %v1085 = vsel %vm194, %v1063, 0
    %v1088 = vsel %vm194, %v1071, 0
    %v1091 = vsel %vm194, %v1070, 0
    %1093 = vmatprep.subr.bf16.mxu0 %v1088
    %1094 = vmatpush1.bf16.msra.mxu0 %v1085
    %1095 = vmatprep.subr.bf16.mxu0 0
    %1096 = vmatpush1.bf16.msra.mxu0 0
    %1097 = vmatprep.subr.bf16.mxu0 0
    %1098 = vmatpush1.bf16.msra.mxu0 0
    %1099 = vmatprep.subr.bf16.mxu0 0
    %1100 = vmatpush1.bf16.msra.mxu0 0
    %1101 = vmatprep.subr.bf16.mxu0 0
    %1102 = vmatpush1.bf16.msra.mxu0 0
    %1103 = vmatprep.subr.bf16.mxu0 0
    %1104 = vmatpush1.bf16.msra.mxu0 0
    %1105 = vmatprep.subr.bf16.mxu0 0
    %1106 = vmatpush1.bf16.msra.mxu0 0
    %1107 = vmatprep.subr.bf16.mxu0 0
    %1108 = vmatpush1.bf16.msra.mxu0 0
    %1109 = vmatprep.subr.bf16.mxu0 0
    %1110 = vmatpush1.bf16.msra.mxu0 0
    %1111 = vmatprep.subr.bf16.mxu0 0
    %1112 = vmatpush1.bf16.msra.mxu0 0
    %1113 = vmatprep.subr.bf16.mxu0 0
    %1114 = vmatpush1.bf16.msra.mxu0 0
    %1115 = vmatprep.subr.bf16.mxu0 0
    %1116 = vmatpush1.bf16.msra.mxu0 0
    %1117 = vmatprep.subr.bf16.mxu0 0
    %1118 = vmatpush1.bf16.msra.mxu0 0
    %1119 = vmatprep.subr.bf16.mxu0 0
    %1120 = vmatpush1.bf16.msra.mxu0 0
    %1121 = vmatprep.subr.bf16.mxu0 0
    %1122 = vmatpush1.bf16.msra.mxu0 0
    %1123 = vmatprep.subr.bf16.mxu0 0
    %1124 = vmatpush1.bf16.msra.mxu0 0
    %1125 = vmatprep.mubr.bf16.mxu0 0
    %1126 = vmatmul.mubr.bf16.gmra.mrb[0].mxu0 %v1073
    %v1127 = vpop.f32.mrb[0].mxu0
    %v1128 = vadd.f32 0.0, %v1127
    %v1129 = vpop.f32.mrb[0].mxu0
    %v1130 = vadd.f32 0.0, %v1129
    %v1131 = vpop.f32.mrb[0].mxu0
    %v1132 = vadd.f32 0.0, %v1131
    %v1133 = vpop.f32.mrb[0].mxu0
    %v1134 = vadd.f32 0.0, %v1133
    %1135 = vmatprep.mubr.bf16.mxu0 0
    %1136 = vmatmul.mubr.bf16.gmra.mrb[0].mxu0 %v1076
    %v1137 = vpop.f32.mrb[0].mxu0
    %v1138 = vadd.f32 0.0, %v1137
    %v1139 = vpop.f32.mrb[0].mxu0
    %v1140 = vadd.f32 0.0, %v1139
    %v1141 = vpop.f32.mrb[0].mxu0
    %v1142 = vadd.f32 0.0, %v1141
    %v1143 = vpop.f32.mrb[0].mxu0
    %v1144 = vadd.f32 0.0, %v1143
    %1145 = vmatprep.mubr.bf16.mxu0 0
    %1146 = vmatmul.mubr.bf16.gmra.mrb[0].mxu0 %v1079
    %v1147 = vpop.f32.mrb[0].mxu0
    %v1148 = vadd.f32 0.0, %v1147
    %v1149 = vpop.f32.mrb[0].mxu0
    %v1150 = vadd.f32 0.0, %v1149
    %v1151 = vpop.f32.mrb[0].mxu0
    %v1152 = vadd.f32 0.0, %v1151
    %v1153 = vpop.f32.mrb[0].mxu0
    %v1154 = vadd.f32 0.0, %v1153
    %1155 = vmatprep.mubr.bf16.mxu0 0
    %1156 = vmatmul.mubr.bf16.gmra.mrb[0].mxu0 %v1082
    %v1157 = vpop.f32.mrb[0].mxu0
    %v1158 = vadd.f32 0.0, %v1157
    %v1159 = vpop.f32.mrb[0].mxu0
    %v1160 = vadd.f32 0.0, %v1159
    %v1161 = vpop.f32.mrb[0].mxu0
    %v1162 = vadd.f32 0.0, %v1161
    %v1163 = vpop.f32.mrb[0].mxu0
    %v1164 = vadd.f32 0.0, %v1163
    %1165 = vdwg.mxu0
    %1166 = vmatprep.subr.bf16.mxu0 0
    %1167 = vmatpush1.bf16.msra.mxu0 %v1091
    %1168 = vmatprep.subr.bf16.mxu0 0
    %1169 = vmatpush1.bf16.msra.mxu0 0
    %1170 = vmatprep.subr.bf16.mxu0 0
    %1171 = vmatpush1.bf16.msra.mxu0 0
    %1172 = vmatprep.subr.bf16.mxu0 0
    %1173 = vmatpush1.bf16.msra.mxu0 0
    %1174 = vmatprep.subr.bf16.mxu0 0
    %1175 = vmatpush1.bf16.msra.mxu0 0
    %1176 = vmatprep.subr.bf16.mxu0 0
    %1177 = vmatpush1.bf16.msra.mxu0 0
    %1178 = vmatprep.subr.bf16.mxu0 0
    %1179 = vmatpush1.bf16.msra.mxu0 0
    %1180 = vmatprep.subr.bf16.mxu0 0
    %1181 = vmatpush1.bf16.msra.mxu0 0
    %1182 = vmatprep.subr.bf16.mxu0 0
    %1183 = vmatpush1.bf16.msra.mxu0 0
    %1184 = vmatprep.subr.bf16.mxu0 0
    %1185 = vmatpush1.bf16.msra.mxu0 0
    %1186 = vmatprep.subr.bf16.mxu0 0
    %1187 = vmatpush1.bf16.msra.mxu0 0
    %1188 = vmatprep.subr.bf16.mxu0 0
    %1189 = vmatpush1.bf16.msra.mxu0 0
    %1190 = vmatprep.subr.bf16.mxu0 0
    %1191 = vmatpush1.bf16.msra.mxu0 0
    %1192 = vmatprep.subr.bf16.mxu0 0
    %1193 = vmatpush1.bf16.msra.mxu0 0
    %1194 = vmatprep.subr.bf16.mxu0 0
    %1195 = vmatpush1.bf16.msra.mxu0 0
    %1196 = vmatprep.subr.bf16.mxu0 0
    %1197 = vmatpush1.bf16.msra.mxu0 0
    %1198 = vmatprep.mubr.bf16.mxu0 0
    %1199 = vmatmul.mubr.bf16.gmra.mrb[0].mxu0 %v1073
    %v1200 = vpop.f32.mrb[0].mxu0
    %v1201 = vadd.f32 0.0, %v1200
    %v1202 = vpop.f32.mrb[0].mxu0
    %v1203 = vpop.f32.mrb[0].mxu0
    %v1204 = vadd.f32 0.0, %v1203
    %v1205 = vpop.f32.mrb[0].mxu0
    %1206 = vmatprep.mubr.bf16.mxu0 0
    %1207 = vmatmul.mubr.bf16.gmra.mrb[0].mxu0 %v1076
    %v1208 = vpop.f32.mrb[0].mxu0
    %v1209 = vadd.f32 0.0, %v1208
    %v1210 = vpop.f32.mrb[0].mxu0
    %v1211 = vpop.f32.mrb[0].mxu0
    %v1212 = vadd.f32 0.0, %v1211
    %v1213 = vpop.f32.mrb[0].mxu0
    %1214 = vmatprep.mubr.bf16.mxu0 0
    %1215 = vmatmul.mubr.bf16.gmra.mrb[0].mxu0 %v1079
    %v1216 = vpop.f32.mrb[0].mxu0
    %v1217 = vadd.f32 0.0, %v1216
    %v1218 = vpop.f32.mrb[0].mxu0
    %v1219 = vpop.f32.mrb[0].mxu0
    %v1220 = vadd.f32 0.0, %v1219
    %v1221 = vpop.f32.mrb[0].mxu0
    %1222 = vmatprep.mubr.bf16.mxu0 0
    %1223 = vmatmul.mubr.bf16.gmra.mrb[0].mxu0 %v1082
    %v1224 = vpop.f32.mrb[0].mxu0
    %v1225 = vadd.f32 0.0, %v1224
    %v1226 = vpop.f32.mrb[0].mxu0
    %v1227 = vpop.f32.mrb[0].mxu0
    %v1228 = vadd.f32 0.0, %v1227
    %v1229 = vpop.f32.mrb[0].mxu0
    %1230 = vdwg.mxu0
    %v1231 = vsel %vm382, %v1128, 0.0
    %v1232 = vsel %vm382, %v1130, 0.0
    %v1233 = vsel %vm382, %v1201, 0.0
    %v1234 = vsel %vm383, %v1132, 0.0
    %v1235 = vsel %vm383, %v1134, 0.0
    %v1236 = vsel %vm383, %v1204, 0.0
    %v1237 = vsel %vm384, %v1138, 0.0
    %v1238 = vsel %vm384, %v1140, 0.0
    %v1239 = vsel %vm384, %v1209, 0.0
    %v1240 = vsel %vm385, %v1142, 0.0
    %v1241 = vsel %vm385, %v1144, 0.0
    %v1242 = vsel %vm385, %v1212, 0.0
    %v1243 = vsel %vm386, %v1148, 0.0
    %v1244 = vsel %vm386, %v1150, 0.0
    %v1245 = vsel %vm386, %v1217, 0.0
    %v1246 = vsel %vm387, %v1152, 0.0
    %v1247 = vsel %vm387, %v1154, 0.0
    %v1248 = vsel %vm387, %v1220, 0.0
    %v1249 = vsel %vm388, %v1158, 0.0
    %v1250 = vsel %vm388, %v1160, 0.0
    %v1251 = vsel %vm388, %v1225, 0.0
    %v1252 = vsel %vm389, %v1162, 0.0
    %v1253 = vsel %vm389, %v1164, 0.0
    %v1254 = vsel %vm389, %v1228, 0.0
    %v1255 = vadd.f32 %v1001, %v1231
    %v1256 = vadd.f32 %v1002, %v1232
    %v1257 = vadd.f32 %v1003, %v1233
    %v1258 = vadd.f32 %v1004, %v1234
    %v1259 = vadd.f32 %v1005, %v1235
    %v1260 = vadd.f32 %v1006, %v1236
    %v1261 = vadd.f32 %v1007, %v1237
    %v1262 = vadd.f32 %v1008, %v1238
    %v1263 = vadd.f32 %v1009, %v1239
    %v1264 = vadd.f32 %v1010, %v1240
    %v1265 = vadd.f32 %v1011, %v1241
    %v1266 = vadd.f32 %v1012, %v1242
    %v1267 = vadd.f32 %v1013, %v1243
    %v1268 = vadd.f32 %v1014, %v1244
    %v1269 = vadd.f32 %v1015, %v1245
    %v1270 = vadd.f32 %v1016, %v1246
    %v1271 = vadd.f32 %v1017, %v1247
    %v1272 = vadd.f32 %v1018, %v1248
    %v1273 = vadd.f32 %v1019, %v1249
    %v1274 = vadd.f32 %v1020, %v1250
    %v1275 = vadd.f32 %v1021, %v1251
    %v1276 = vadd.f32 %v1022, %v1252
    %v1277 = vadd.f32 %v1023, %v1253
    %v1278 = vadd.f32 %v1024, %v1254
    %v1279 = vld [vmem:[%s0 + $0x4] sm:$0xf]
    %v1280 = vld [vmem:[%s0 + $0x8] sm:$0xf]
    %v1281 = vld [vmem:[%s0 + $0xc] sm:$0xf]
    %v1282 = vld [vmem:[%s0 + $0x10] sm:$0xf]
    %v1283 = vld [vmem:[%s0 + $0x14] sm:$0xf]
    %v1284 = vld [vmem:[%s0 + $0x18] sm:$0xf]
    %v1285 = vld [vmem:[%s0 + $0x1c] sm:$0xf]
    %v1286 = vld [vmem:[%s0 + $0x20] sm:$0xf]
    %v1287 = vld [vmem:[%s0 + $0x24] sm:$0x1]
    %s1288 = scalar_lea.vmem [#allocation2], 24
    %v1289 = vld [vmem:[%s1288] sm:$0x3f]
    %v1299 = vunpack.c.l.b16 %v1279
    %v1300 = vunpack.c.l.b16 %v1280
    %v1301 = vunpack.c.l.b16 %v1281
    %v1302 = vunpack.c.l.b16 %v1282
    %v1303 = vunpack.c.l.b16 %v1283
    %v1304 = vunpack.c.l.b16 %v1284
    %v1305 = vunpack.c.l.b16 %v1285
    %v1306 = vunpack.c.l.b16 %v1286
    %v1307 = vunpack.c.l.b16 %v1287
    %v1308 = vpack.c.b16 %v1300, %v1299
    %v1309 = vpack.c.b16 %v1302, %v1301
    %v1310 = vpack.c.b16 %v1304, %v1303
    %v1311 = vpack.c.b16 %v1306, %v1305
    %v1312 = vpack.c.b16 %v1307, %v1307
    %v1314 = vshrl.u32 %v1308, 16
    %v1316 = vshll.u32 %v1308, 16
    %v1318 = vrot.slane %v1316, 1
    %v1319 = vor.u32 %v1314, %v1318
    %v1321 = vshll.u32 %v1309, 16
    %v1323 = vrot.slane %v1321, 1
    %v1324 = vsel %vm472, %v1319, %v1323
    %v1325 = vshrl.u32 %v1309, 16
    %v1327 = vor.u32 %v1325, %v1323
    %v1329 = vshll.u32 %v1310, 16
    %v1331 = vrot.slane %v1329, 1
    %v1332 = vsel %vm472, %v1327, %v1331
    %v1333 = vshrl.u32 %v1310, 16
    %v1335 = vor.u32 %v1333, %v1331
    %v1337 = vshll.u32 %v1311, 16
    %v1339 = vrot.slane %v1337, 1
    %v1340 = vsel %vm472, %v1335, %v1339
    %v1341 = vshrl.u32 %v1311, 16
    %v1343 = vor.u32 %v1341, %v1339
    %v1345 = vshll.u32 %v1312, 16
    %v1347 = vrot.slane %v1345, 1
    %v1348 = vsel %vm472, %v1343, %v1347
    %v1350 = vcombine.high %v1289, %v1289
    %v1352 = vunpack.c.l.s4 1983009808
    %v1353 = vunpack.c.0.s8 %v1352
    %v1354 = vlaneseq
    %v1355 = vshrl.u32 %v1354, 7
    %v1356 = vsub.s32 %v1353, %v1355
    %v1357 = vrot.slane %v1289, %v1356
    %v1359 = vunpack.c.l.s4 1983009808
    %v1360 = vunpack.c.0.s8 %v1359
    %v1361 = vlaneseq
    %v1362 = vshrl.u32 %v1361, 7
    %v1363 = vsub.s32 %v1360, %v1362
    %v1364 = vrot.slane %v1350, %v1363
    %v1365 = vcombine.high %v1357, %v1357
    %v1367 = vsel %vm181, %v1324, 0
    %v1370 = vsel %vm181, %v1332, 0
    %v1373 = vsel %vm181, %v1340, 0
    %v1376 = vsel %vm181, %v1348, 0
    %v1379 = vsel %vm194, %v1357, 0
    %v1382 = vsel %vm194, %v1365, 0
    %v1385 = vsel %vm194, %v1364, 0
    %1387 = vmatprep.subr.bf16.mxu0 %v1382
    %1388 = vmatpush1.bf16.msra.mxu0 %v1379
    %1389 = vmatprep.subr.bf16.mxu0 0
    %1390 = vmatpush1.bf16.msra.mxu0 0
    %1391 = vmatprep.subr.bf16.mxu0 0
    %1392 = vmatpush1.bf16.msra.mxu0 0
    %1393 = vmatprep.subr.bf16.mxu0 0
    %1394 = vmatpush1.bf16.msra.mxu0 0
    %1395 = vmatprep.subr.bf16.mxu0 0
    %1396 = vmatpush1.bf16.msra.mxu0 0
    %1397 = vmatprep.subr.bf16.mxu0 0
    %1398 = vmatpush1.bf16.msra.mxu0 0
    %1399 = vmatprep.subr.bf16.mxu0 0
    %1400 = vmatpush1.bf16.msra.mxu0 0
    %1401 = vmatprep.subr.bf16.mxu0 0
    %1402 = vmatpush1.bf16.msra.mxu0 0
    %1403 = vmatprep.subr.bf16.mxu0 0
    %1404 = vmatpush1.bf16.msra.mxu0 0
    %1405 = vmatprep.subr.bf16.mxu0 0
    %1406 = vmatpush1.bf16.msra.mxu0 0
    %1407 = vmatprep.subr.bf16.mxu0 0
    %1408 = vmatpush1.bf16.msra.mxu0 0
    %1409 = vmatprep.subr.bf16.mxu0 0
    %1410 = vmatpush1.bf16.msra.mxu0 0
    %1411 = vmatprep.subr.bf16.mxu0 0
    %1412 = vmatpush1.bf16.msra.mxu0 0
    %1413 = vmatprep.subr.bf16.mxu0 0
    %1414 = vmatpush1.bf16.msra.mxu0 0
    %1415 = vmatprep.subr.bf16.mxu0 0
    %1416 = vmatpush1.bf16.msra.mxu0 0
    %1417 = vmatprep.subr.bf16.mxu0 0
    %1418 = vmatpush1.bf16.msra.mxu0 0
    %1419 = vmatprep.mubr.bf16.mxu0 0
    %1420 = vmatmul.mubr.bf16.gmra.mrb[0].mxu0 %v1367
    %v1421 = vpop.f32.mrb[0].mxu0
    %v1422 = vadd.f32 0.0, %v1421
    %v1423 = vpop.f32.mrb[0].mxu0
    %v1424 = vadd.f32 0.0, %v1423
    %v1425 = vpop.f32.mrb[0].mxu0
    %v1426 = vadd.f32 0.0, %v1425
    %v1427 = vpop.f32.mrb[0].mxu0
    %v1428 = vadd.f32 0.0, %v1427
    %1429 = vmatprep.mubr.bf16.mxu0 0
    %1430 = vmatmul.mubr.bf16.gmra.mrb[0].mxu0 %v1370
    %v1431 = vpop.f32.mrb[0].mxu0
    %v1432 = vadd.f32 0.0, %v1431
    %v1433 = vpop.f32.mrb[0].mxu0
    %v1434 = vadd.f32 0.0, %v1433
    %v1435 = vpop.f32.mrb[0].mxu0
    %v1436 = vadd.f32 0.0, %v1435
    %v1437 = vpop.f32.mrb[0].mxu0
    %v1438 = vadd.f32 0.0, %v1437
    %1439 = vmatprep.mubr.bf16.mxu0 0
    %1440 = vmatmul.mubr.bf16.gmra.mrb[0].mxu0 %v1373
    %v1441 = vpop.f32.mrb[0].mxu0
    %v1442 = vadd.f32 0.0, %v1441
    %v1443 = vpop.f32.mrb[0].mxu0
    %v1444 = vadd.f32 0.0, %v1443
    %v1445 = vpop.f32.mrb[0].mxu0
    %v1446 = vadd.f32 0.0, %v1445
    %v1447 = vpop.f32.mrb[0].mxu0
    %v1448 = vadd.f32 0.0, %v1447
    %1449 = vmatprep.mubr.bf16.mxu0 0
    %1450 = vmatmul.mubr.bf16.gmra.mrb[0].mxu0 %v1376
    %v1451 = vpop.f32.mrb[0].mxu0
    %v1452 = vadd.f32 0.0, %v1451
    %v1453 = vpop.f32.mrb[0].mxu0
    %v1454 = vadd.f32 0.0, %v1453
    %v1455 = vpop.f32.mrb[0].mxu0
    %v1456 = vadd.f32 0.0, %v1455
    %v1457 = vpop.f32.mrb[0].mxu0
    %v1458 = vadd.f32 0.0, %v1457
    %1459 = vdwg.mxu0
    %1460 = vmatprep.subr.bf16.mxu0 0
    %1461 = vmatpush1.bf16.msra.mxu0 %v1385
    %1462 = vmatprep.subr.bf16.mxu0 0
    %1463 = vmatpush1.bf16.msra.mxu0 0
    %1464 = vmatprep.subr.bf16.mxu0 0
    %1465 = vmatpush1.bf16.msra.mxu0 0
    %1466 = vmatprep.subr.bf16.mxu0 0
    %1467 = vmatpush1.bf16.msra.mxu0 0
    %1468 = vmatprep.subr.bf16.mxu0 0
    %1469 = vmatpush1.bf16.msra.mxu0 0
    %1470 = vmatprep.subr.bf16.mxu0 0
    %1471 = vmatpush1.bf16.msra.mxu0 0
    %1472 = vmatprep.subr.bf16.mxu0 0
    %1473 = vmatpush1.bf16.msra.mxu0 0
    %1474 = vmatprep.subr.bf16.mxu0 0
    %1475 = vmatpush1.bf16.msra.mxu0 0
    %1476 = vmatprep.subr.bf16.mxu0 0
    %1477 = vmatpush1.bf16.msra.mxu0 0
    %1478 = vmatprep.subr.bf16.mxu0 0
    %1479 = vmatpush1.bf16.msra.mxu0 0
    %1480 = vmatprep.subr.bf16.mxu0 0
    %1481 = vmatpush1.bf16.msra.mxu0 0
    %1482 = vmatprep.subr.bf16.mxu0 0
    %1483 = vmatpush1.bf16.msra.mxu0 0
    %1484 = vmatprep.subr.bf16.mxu0 0
    %1485 = vmatpush1.bf16.msra.mxu0 0
    %1486 = vmatprep.subr.bf16.mxu0 0
    %1487 = vmatpush1.bf16.msra.mxu0 0
    %1488 = vmatprep.subr.bf16.mxu0 0
    %1489 = vmatpush1.bf16.msra.mxu0 0
    %1490 = vmatprep.subr.bf16.mxu0 0
    %1491 = vmatpush1.bf16.msra.mxu0 0
    %1492 = vmatprep.mubr.bf16.mxu0 0
    %1493 = vmatmul.mubr.bf16.gmra.mrb[0].mxu0 %v1367
    %v1494 = vpop.f32.mrb[0].mxu0
    %v1495 = vadd.f32 0.0, %v1494
    %v1496 = vpop.f32.mrb[0].mxu0
    %v1497 = vpop.f32.mrb[0].mxu0
    %v1498 = vadd.f32 0.0, %v1497
    %v1499 = vpop.f32.mrb[0].mxu0
    %1500 = vmatprep.mubr.bf16.mxu0 0
    %1501 = vmatmul.mubr.bf16.gmra.mrb[0].mxu0 %v1370
    %v1502 = vpop.f32.mrb[0].mxu0
    %v1503 = vadd.f32 0.0, %v1502
    %v1504 = vpop.f32.mrb[0].mxu0
    %v1505 = vpop.f32.mrb[0].mxu0
    %v1506 = vadd.f32 0.0, %v1505
    %v1507 = vpop.f32.mrb[0].mxu0
    %1508 = vmatprep.mubr.bf16.mxu0 0
    %1509 = vmatmul.mubr.bf16.gmra.mrb[0].mxu0 %v1373
    %v1510 = vpop.f32.mrb[0].mxu0
    %v1511 = vadd.f32 0.0, %v1510
    %v1512 = vpop.f32.mrb[0].mxu0
    %v1513 = vpop.f32.mrb[0].mxu0
    %v1514 = vadd.f32 0.0, %v1513
    %v1515 = vpop.f32.mrb[0].mxu0
    %1516 = vmatprep.mubr.bf16.mxu0 0
    %1517 = vmatmul.mubr.bf16.gmra.mrb[0].mxu0 %v1376
    %v1518 = vpop.f32.mrb[0].mxu0
    %v1519 = vadd.f32 0.0, %v1518
    %v1520 = vpop.f32.mrb[0].mxu0
    %v1521 = vpop.f32.mrb[0].mxu0
    %v1522 = vadd.f32 0.0, %v1521
    %v1523 = vpop.f32.mrb[0].mxu0
    %1524 = vdwg.mxu0
    %v1525 = vadd.f32 %v1255, %v1422
    %v1526 = vadd.f32 %v1256, %v1424
    %v1527 = vadd.f32 %v1257, %v1495
    %v1528 = vadd.f32 %v1258, %v1426
    %v1529 = vadd.f32 %v1259, %v1428
    %v1530 = vadd.f32 %v1260, %v1498
    %v1531 = vadd.f32 %v1261, %v1432
    %v1532 = vadd.f32 %v1262, %v1434
    %v1533 = vadd.f32 %v1263, %v1503
    %v1534 = vadd.f32 %v1264, %v1436
    %v1535 = vadd.f32 %v1265, %v1438
    %v1536 = vadd.f32 %v1266, %v1506
    %v1537 = vadd.f32 %v1267, %v1442
    %v1538 = vadd.f32 %v1268, %v1444
    %v1539 = vadd.f32 %v1269, %v1511
    %v1540 = vadd.f32 %v1270, %v1446
    %v1541 = vadd.f32 %v1271, %v1448
    %v1542 = vadd.f32 %v1272, %v1514
    %v1543 = vadd.f32 %v1273, %v1452
    %v1544 = vadd.f32 %v1274, %v1454
    %v1545 = vadd.f32 %v1275, %v1519
    %v1546 = vadd.f32 %v1276, %v1456
    %v1547 = vadd.f32 %v1277, %v1458
    %v1548 = vadd.f32 %v1278, %v1522
    %v1549 = vld [vmem:[%s0 + $0x4] sm:$0xe]
    %v1550 = vld [vmem:[%s0 + $0x8] sm:$0xf]
    %v1551 = vld [vmem:[%s0 + $0xc] sm:$0xf]
    %v1552 = vld [vmem:[%s0 + $0x10] sm:$0xf]
    %v1553 = vld [vmem:[%s0 + $0x14] sm:$0xf]
    %v1554 = vld [vmem:[%s0 + $0x18] sm:$0xf]
    %v1555 = vld [vmem:[%s0 + $0x1c] sm:$0xf]
    %v1556 = vld [vmem:[%s0 + $0x20] sm:$0xf]
    %v1557 = vld [vmem:[%s0 + $0x24] sm:$0x1]
    %s1558 = scalar_lea.vmem [#allocation2], 30
    %v1559 = vld [vmem:[%s1558] sm:$0x3f]
    %v1569 = vunpack.c.l.b16 %v1549
    %v1570 = vunpack.c.l.b16 %v1550
    %v1571 = vunpack.c.l.b16 %v1551
    %v1572 = vunpack.c.l.b16 %v1552
    %v1573 = vunpack.c.l.b16 %v1553
    %v1574 = vunpack.c.l.b16 %v1554
    %v1575 = vunpack.c.l.b16 %v1555
    %v1576 = vunpack.c.l.b16 %v1556
    %v1577 = vunpack.c.l.b16 %v1557
    %v1578 = vpack.c.b16 %v1570, %v1569
    %v1579 = vpack.c.b16 %v1572, %v1571
    %v1580 = vpack.c.b16 %v1574, %v1573
    %v1581 = vpack.c.b16 %v1576, %v1575
    %v1582 = vpack.c.b16 %v1577, %v1577
    %v1583 = vrot.slane %v1578, 1
    %v1584 = vrot.slane %v1579, 1
    %v1585 = vsel %vm743, %v1583, %v1584
    %v1586 = vrot.slane %v1580, 1
    %v1587 = vsel %vm743, %v1584, %v1586
    %v1588 = vrot.slane %v1581, 1
    %v1589 = vsel %vm743, %v1586, %v1588
    %v1590 = vrot.slane %v1582, 1
    %v1591 = vsel %vm743, %v1588, %v1590
    %v1593 = vcombine.high %v1559, %v1559
    %v1595 = vunpack.c.l.s4 1983009808
    %v1596 = vunpack.c.0.s8 %v1595
    %v1597 = vlaneseq
    %v1598 = vshrl.u32 %v1597, 7
    %v1599 = vsub.s32 %v1596, %v1598
    %v1600 = vrot.slane %v1559, %v1599
    %v1602 = vunpack.c.l.s4 1983009808
    %v1603 = vunpack.c.0.s8 %v1602
    %v1604 = vlaneseq
    %v1605 = vshrl.u32 %v1604, 7
    %v1606 = vsub.s32 %v1603, %v1605
    %v1607 = vrot.slane %v1593, %v1606
    %v1608 = vcombine.high %v1600, %v1600
    %v1610 = vsel %vm181, %v1585, 0
    %v1613 = vsel %vm181, %v1587, 0
    %v1616 = vsel %vm181, %v1589, 0
    %v1619 = vsel %vm181, %v1591, 0
    %v1622 = vsel %vm194, %v1600, 0
    %v1625 = vsel %vm194, %v1608, 0
    %v1628 = vsel %vm194, %v1607, 0
    %1630 = vmatprep.subr.bf16.mxu0 %v1625
    %1631 = vmatpush1.bf16.msra.mxu0 %v1622
    %1632 = vmatprep.subr.bf16.mxu0 0
    %1633 = vmatpush1.bf16.msra.mxu0 0
    %1634 = vmatprep.subr.bf16.mxu0 0
    %1635 = vmatpush1.bf16.msra.mxu0 0
    %1636 = vmatprep.subr.bf16.mxu0 0
    %1637 = vmatpush1.bf16.msra.mxu0 0
    %1638 = vmatprep.subr.bf16.mxu0 0
    %1639 = vmatpush1.bf16.msra.mxu0 0
    %1640 = vmatprep.subr.bf16.mxu0 0
    %1641 = vmatpush1.bf16.msra.mxu0 0
    %1642 = vmatprep.subr.bf16.mxu0 0
    %1643 = vmatpush1.bf16.msra.mxu0 0
    %1644 = vmatprep.subr.bf16.mxu0 0
    %1645 = vmatpush1.bf16.msra.mxu0 0
    %1646 = vmatprep.subr.bf16.mxu0 0
    %1647 = vmatpush1.bf16.msra.mxu0 0
    %1648 = vmatprep.subr.bf16.mxu0 0
    %1649 = vmatpush1.bf16.msra.mxu0 0
    %1650 = vmatprep.subr.bf16.mxu0 0
    %1651 = vmatpush1.bf16.msra.mxu0 0
    %1652 = vmatprep.subr.bf16.mxu0 0
    %1653 = vmatpush1.bf16.msra.mxu0 0
    %1654 = vmatprep.subr.bf16.mxu0 0
    %1655 = vmatpush1.bf16.msra.mxu0 0
    %1656 = vmatprep.subr.bf16.mxu0 0
    %1657 = vmatpush1.bf16.msra.mxu0 0
    %1658 = vmatprep.subr.bf16.mxu0 0
    %1659 = vmatpush1.bf16.msra.mxu0 0
    %1660 = vmatprep.subr.bf16.mxu0 0
    %1661 = vmatpush1.bf16.msra.mxu0 0
    %1662 = vmatprep.mubr.bf16.mxu0 0
    %1663 = vmatmul.mubr.bf16.gmra.mrb[0].mxu0 %v1610
    %v1664 = vpop.f32.mrb[0].mxu0
    %v1665 = vadd.f32 0.0, %v1664
    %v1666 = vpop.f32.mrb[0].mxu0
    %v1667 = vadd.f32 0.0, %v1666
    %v1668 = vpop.f32.mrb[0].mxu0
    %v1669 = vadd.f32 0.0, %v1668
    %v1670 = vpop.f32.mrb[0].mxu0
    %v1671 = vadd.f32 0.0, %v1670
    %1672 = vmatprep.mubr.bf16.mxu0 0
    %1673 = vmatmul.mubr.bf16.gmra.mrb[0].mxu0 %v1613
    %v1674 = vpop.f32.mrb[0].mxu0
    %v1675 = vadd.f32 0.0, %v1674
    %v1676 = vpop.f32.mrb[0].mxu0
    %v1677 = vadd.f32 0.0, %v1676
    %v1678 = vpop.f32.mrb[0].mxu0
    %v1679 = vadd.f32 0.0, %v1678
    %v1680 = vpop.f32.mrb[0].mxu0
    %v1681 = vadd.f32 0.0, %v1680
    %1682 = vmatprep.mubr.bf16.mxu0 0
    %1683 = vmatmul.mubr.bf16.gmra.mrb[0].mxu0 %v1616
    %v1684 = vpop.f32.mrb[0].mxu0
    %v1685 = vadd.f32 0.0, %v1684
    %v1686 = vpop.f32.mrb[0].mxu0
    %v1687 = vadd.f32 0.0, %v1686
    %v1688 = vpop.f32.mrb[0].mxu0
    %v1689 = vadd.f32 0.0, %v1688
    %v1690 = vpop.f32.mrb[0].mxu0
    %v1691 = vadd.f32 0.0, %v1690
    %1692 = vmatprep.mubr.bf16.mxu0 0
    %1693 = vmatmul.mubr.bf16.gmra.mrb[0].mxu0 %v1619
    %v1694 = vpop.f32.mrb[0].mxu0
    %v1695 = vadd.f32 0.0, %v1694
    %v1696 = vpop.f32.mrb[0].mxu0
    %v1697 = vadd.f32 0.0, %v1696
    %v1698 = vpop.f32.mrb[0].mxu0
    %v1699 = vadd.f32 0.0, %v1698
    %v1700 = vpop.f32.mrb[0].mxu0
    %v1701 = vadd.f32 0.0, %v1700
    %1702 = vdwg.mxu0
    %1703 = vmatprep.subr.bf16.mxu0 0
    %1704 = vmatpush1.bf16.msra.mxu0 %v1628
    %1705 = vmatprep.subr.bf16.mxu0 0
    %1706 = vmatpush1.bf16.msra.mxu0 0
    %1707 = vmatprep.subr.bf16.mxu0 0
    %1708 = vmatpush1.bf16.msra.mxu0 0
    %1709 = vmatprep.subr.bf16.mxu0 0
    %1710 = vmatpush1.bf16.msra.mxu0 0
    %1711 = vmatprep.subr.bf16.mxu0 0
    %1712 = vmatpush1.bf16.msra.mxu0 0
    %1713 = vmatprep.subr.bf16.mxu0 0
    %1714 = vmatpush1.bf16.msra.mxu0 0
    %1715 = vmatprep.subr.bf16.mxu0 0
    %1716 = vmatpush1.bf16.msra.mxu0 0
    %1717 = vmatprep.subr.bf16.mxu0 0
    %1718 = vmatpush1.bf16.msra.mxu0 0
    %1719 = vmatprep.subr.bf16.mxu0 0
    %1720 = vmatpush1.bf16.msra.mxu0 0
    %1721 = vmatprep.subr.bf16.mxu0 0
    %1722 = vmatpush1.bf16.msra.mxu0 0
    %1723 = vmatprep.subr.bf16.mxu0 0
    %1724 = vmatpush1.bf16.msra.mxu0 0
    %1725 = vmatprep.subr.bf16.mxu0 0
    %1726 = vmatpush1.bf16.msra.mxu0 0
    %1727 = vmatprep.subr.bf16.mxu0 0
    %1728 = vmatpush1.bf16.msra.mxu0 0
    %1729 = vmatprep.subr.bf16.mxu0 0
    %1730 = vmatpush1.bf16.msra.mxu0 0
    %1731 = vmatprep.subr.bf16.mxu0 0
    %1732 = vmatpush1.bf16.msra.mxu0 0
    %1733 = vmatprep.subr.bf16.mxu0 0
    %1734 = vmatpush1.bf16.msra.mxu0 0
    %1735 = vmatprep.mubr.bf16.mxu0 0
    %1736 = vmatmul.mubr.bf16.gmra.mrb[0].mxu0 %v1610
    %v1737 = vpop.f32.mrb[0].mxu0
    %v1738 = vadd.f32 0.0, %v1737
    %v1739 = vpop.f32.mrb[0].mxu0
    %v1740 = vpop.f32.mrb[0].mxu0
    %v1741 = vadd.f32 0.0, %v1740
    %v1742 = vpop.f32.mrb[0].mxu0
    %1743 = vmatprep.mubr.bf16.mxu0 0
    %1744 = vmatmul.mubr.bf16.gmra.mrb[0].mxu0 %v1613
    %v1745 = vpop.f32.mrb[0].mxu0
    %v1746 = vadd.f32 0.0, %v1745
    %v1747 = vpop.f32.mrb[0].mxu0
    %v1748 = vpop.f32.mrb[0].mxu0
    %v1749 = vadd.f32 0.0, %v1748
    %v1750 = vpop.f32.mrb[0].mxu0
    %1751 = vmatprep.mubr.bf16.mxu0 0
    %1752 = vmatmul.mubr.bf16.gmra.mrb[0].mxu0 %v1616
    %v1753 = vpop.f32.mrb[0].mxu0
    %v1754 = vadd.f32 0.0, %v1753
    %v1755 = vpop.f32.mrb[0].mxu0
    %v1756 = vpop.f32.mrb[0].mxu0
    %v1757 = vadd.f32 0.0, %v1756
    %v1758 = vpop.f32.mrb[0].mxu0
    %1759 = vmatprep.mubr.bf16.mxu0 0
    %1760 = vmatmul.mubr.bf16.gmra.mrb[0].mxu0 %v1619
    %v1761 = vpop.f32.mrb[0].mxu0
    %v1762 = vadd.f32 0.0, %v1761
    %v1763 = vpop.f32.mrb[0].mxu0
    %v1764 = vpop.f32.mrb[0].mxu0
    %v1765 = vadd.f32 0.0, %v1764
    %v1766 = vpop.f32.mrb[0].mxu0
    %1767 = vdwg.mxu0
    %v1768 = vsel %vm969, %v1665, 0.0
    %v1769 = vsel %vm969, %v1667, 0.0
    %v1770 = vsel %vm969, %v1738, 0.0
    %v1771 = vsel %vm970, %v1669, 0.0
    %v1772 = vsel %vm970, %v1671, 0.0
    %v1773 = vsel %vm970, %v1741, 0.0
    %v1774 = vsel %vm971, %v1675, 0.0
    %v1775 = vsel %vm971, %v1677, 0.0
    %v1776 = vsel %vm971, %v1746, 0.0
    %v1777 = vsel %vm972, %v1679, 0.0
    %v1778 = vsel %vm972, %v1681, 0.0
    %v1779 = vsel %vm972, %v1749, 0.0
    %v1780 = vsel %vm973, %v1685, 0.0
    %v1781 = vsel %vm973, %v1687, 0.0
    %v1782 = vsel %vm973, %v1754, 0.0
    %v1783 = vsel %vm974, %v1689, 0.0
    %v1784 = vsel %vm974, %v1691, 0.0
    %v1785 = vsel %vm974, %v1757, 0.0
    %v1786 = vsel %vm975, %v1695, 0.0
    %v1787 = vsel %vm975, %v1697, 0.0
    %v1788 = vsel %vm975, %v1762, 0.0
    %v1789 = vsel %vm976, %v1699, 0.0
    %v1790 = vsel %vm976, %v1701, 0.0
    %v1791 = vsel %vm976, %v1765, 0.0
    %v1792 = vadd.f32 %v1525, %v1768
    %v1793 = vadd.f32 %v1526, %v1769
    %v1794 = vadd.f32 %v1527, %v1770
    %v1795 = vadd.f32 %v1528, %v1771
    %v1796 = vadd.f32 %v1529, %v1772
    %v1797 = vadd.f32 %v1530, %v1773
    %v1798 = vadd.f32 %v1531, %v1774
    %v1799 = vadd.f32 %v1532, %v1775
    %v1800 = vadd.f32 %v1533, %v1776
    %v1801 = vadd.f32 %v1534, %v1777
    %v1802 = vadd.f32 %v1535, %v1778
    %v1803 = vadd.f32 %v1536, %v1779
    %v1804 = vadd.f32 %v1537, %v1780
    %v1805 = vadd.f32 %v1538, %v1781
    %v1806 = vadd.f32 %v1539, %v1782
    %v1807 = vadd.f32 %v1540, %v1783
    %v1808 = vadd.f32 %v1541, %v1784
    %v1809 = vadd.f32 %v1542, %v1785
    %v1810 = vadd.f32 %v1543, %v1786
    %v1811 = vadd.f32 %v1544, %v1787
    %v1812 = vadd.f32 %v1545, %v1788
    %v1813 = vadd.f32 %v1546, %v1789
    %v1814 = vadd.f32 %v1547, %v1790
    %v1815 = vadd.f32 %v1548, %v1791
    %v1816 = vld [vmem:[%s0 + $0x8] sm:$0xf]
    %v1817 = vld [vmem:[%s0 + $0xc] sm:$0xf]
    %v1818 = vld [vmem:[%s0 + $0x10] sm:$0xf]
    %v1819 = vld [vmem:[%s0 + $0x14] sm:$0xf]
    %v1820 = vld [vmem:[%s0 + $0x18] sm:$0xf]
    %v1821 = vld [vmem:[%s0 + $0x1c] sm:$0xf]
    %v1822 = vld [vmem:[%s0 + $0x20] sm:$0xf]
    %v1823 = vld [vmem:[%s0 + $0x24] sm:$0xf]
    %s1824 = scalar_lea.vmem [#allocation2], 36
    %v1825 = vld [vmem:[%s1824] sm:$0x3f]
    %v1834 = vunpack.c.l.b16 %v1816
    %v1835 = vunpack.c.l.b16 %v1817
    %v1836 = vunpack.c.l.b16 %v1818
    %v1837 = vunpack.c.l.b16 %v1819
    %v1838 = vunpack.c.l.b16 %v1820
    %v1839 = vunpack.c.l.b16 %v1821
    %v1840 = vunpack.c.l.b16 %v1822
    %v1841 = vunpack.c.l.b16 %v1823
    %v1842 = vpack.c.b16 %v1835, %v1834
    %v1843 = vpack.c.b16 %v1837, %v1836
    %v1844 = vpack.c.b16 %v1839, %v1838
    %v1845 = vpack.c.b16 %v1841, %v1840
    %v1847 = vcombine.high %v1825, %v1825
    %v1849 = vunpack.c.l.s4 1983009808
    %v1850 = vunpack.c.0.s8 %v1849
    %v1851 = vlaneseq
    %v1852 = vshrl.u32 %v1851, 7
    %v1853 = vsub.s32 %v1850, %v1852
    %v1854 = vrot.slane %v1825, %v1853
    %v1856 = vunpack.c.l.s4 1983009808
    %v1857 = vunpack.c.0.s8 %v1856
    %v1858 = vlaneseq
    %v1859 = vshrl.u32 %v1858, 7
    %v1860 = vsub.s32 %v1857, %v1859
    %v1861 = vrot.slane %v1847, %v1860
    %v1862 = vcombine.high %v1854, %v1854
    %v1864 = vsel %vm181, %v1842, 0
    %v1867 = vsel %vm181, %v1843, 0
    %v1870 = vsel %vm181, %v1844, 0
    %v1873 = vsel %vm181, %v1845, 0
    %v1876 = vsel %vm194, %v1854, 0
    %v1879 = vsel %vm194, %v1862, 0
    %v1882 = vsel %vm194, %v1861, 0
    %1884 = vmatprep.subr.bf16.mxu0 %v1879
    %1885 = vmatpush1.bf16.msra.mxu0 %v1876
    %1886 = vmatprep.subr.bf16.mxu0 0
    %1887 = vmatpush1.bf16.msra.mxu0 0
    %1888 = vmatprep.subr.bf16.mxu0 0
    %1889 = vmatpush1.bf16.msra.mxu0 0
    %1890 = vmatprep.subr.bf16.mxu0 0
    %1891 = vmatpush1.bf16.msra.mxu0 0
    %1892 = vmatprep.subr.bf16.mxu0 0
    %1893 = vmatpush1.bf16.msra.mxu0 0
    %1894 = vmatprep.subr.bf16.mxu0 0
    %1895 = vmatpush1.bf16.msra.mxu0 0
    %1896 = vmatprep.subr.bf16.mxu0 0
    %1897 = vmatpush1.bf16.msra.mxu0 0
    %1898 = vmatprep.subr.bf16.mxu0 0
    %1899 = vmatpush1.bf16.msra.mxu0 0
    %1900 = vmatprep.subr.bf16.mxu0 0
    %1901 = vmatpush1.bf16.msra.mxu0 0
    %1902 = vmatprep.subr.bf16.mxu0 0
    %1903 = vmatpush1.bf16.msra.mxu0 0
    %1904 = vmatprep.subr.bf16.mxu0 0
    %1905 = vmatpush1.bf16.msra.mxu0 0
    %1906 = vmatprep.subr.bf16.mxu0 0
    %1907 = vmatpush1.bf16.msra.mxu0 0
    %1908 = vmatprep.subr.bf16.mxu0 0
    %1909 = vmatpush1.bf16.msra.mxu0 0
    %1910 = vmatprep.subr.bf16.mxu0 0
    %1911 = vmatpush1.bf16.msra.mxu0 0
    %1912 = vmatprep.subr.bf16.mxu0 0
    %1913 = vmatpush1.bf16.msra.mxu0 0
    %1914 = vmatprep.subr.bf16.mxu0 0
    %1915 = vmatpush1.bf16.msra.mxu0 0
    %1916 = vmatprep.mubr.bf16.mxu0 0
    %1917 = vmatmul.mubr.bf16.gmra.mrb[0].mxu0 %v1864
    %v1918 = vpop.f32.mrb[0].mxu0
    %v1919 = vadd.f32 0.0, %v1918
    %v1920 = vpop.f32.mrb[0].mxu0
    %v1921 = vadd.f32 0.0, %v1920
    %v1922 = vpop.f32.mrb[0].mxu0
    %v1923 = vadd.f32 0.0, %v1922
    %v1924 = vpop.f32.mrb[0].mxu0
    %v1925 = vadd.f32 0.0, %v1924
    %1926 = vmatprep.mubr.bf16.mxu0 0
    %1927 = vmatmul.mubr.bf16.gmra.mrb[0].mxu0 %v1867
    %v1928 = vpop.f32.mrb[0].mxu0
    %v1929 = vadd.f32 0.0, %v1928
    %v1930 = vpop.f32.mrb[0].mxu0
    %v1931 = vadd.f32 0.0, %v1930
    %v1932 = vpop.f32.mrb[0].mxu0
    %v1933 = vadd.f32 0.0, %v1932
    %v1934 = vpop.f32.mrb[0].mxu0
    %v1935 = vadd.f32 0.0, %v1934
    %1936 = vmatprep.mubr.bf16.mxu0 0
    %1937 = vmatmul.mubr.bf16.gmra.mrb[0].mxu0 %v1870
    %v1938 = vpop.f32.mrb[0].mxu0
    %v1939 = vadd.f32 0.0, %v1938
    %v1940 = vpop.f32.mrb[0].mxu0
    %v1941 = vadd.f32 0.0, %v1940
    %v1942 = vpop.f32.mrb[0].mxu0
    %v1943 = vadd.f32 0.0, %v1942
    %v1944 = vpop.f32.mrb[0].mxu0
    %v1945 = vadd.f32 0.0, %v1944
    %1946 = vmatprep.mubr.bf16.mxu0 0
    %1947 = vmatmul.mubr.bf16.gmra.mrb[0].mxu0 %v1873
    %v1948 = vpop.f32.mrb[0].mxu0
    %v1949 = vadd.f32 0.0, %v1948
    %v1950 = vpop.f32.mrb[0].mxu0
    %v1951 = vadd.f32 0.0, %v1950
    %v1952 = vpop.f32.mrb[0].mxu0
    %v1953 = vadd.f32 0.0, %v1952
    %v1954 = vpop.f32.mrb[0].mxu0
    %v1955 = vadd.f32 0.0, %v1954
    %1956 = vdwg.mxu0
    %1957 = vmatprep.subr.bf16.mxu0 0
    %1958 = vmatpush1.bf16.msra.mxu0 %v1882
    %1959 = vmatprep.subr.bf16.mxu0 0
    %1960 = vmatpush1.bf16.msra.mxu0 0
    %1961 = vmatprep.subr.bf16.mxu0 0
    %1962 = vmatpush1.bf16.msra.mxu0 0
    %1963 = vmatprep.subr.bf16.mxu0 0
    %1964 = vmatpush1.bf16.msra.mxu0 0
    %1965 = vmatprep.subr.bf16.mxu0 0
    %1966 = vmatpush1.bf16.msra.mxu0 0
    %1967 = vmatprep.subr.bf16.mxu0 0
    %1968 = vmatpush1.bf16.msra.mxu0 0
    %1969 = vmatprep.subr.bf16.mxu0 0
    %1970 = vmatpush1.bf16.msra.mxu0 0
    %1971 = vmatprep.subr.bf16.mxu0 0
    %1972 = vmatpush1.bf16.msra.mxu0 0
    %1973 = vmatprep.subr.bf16.mxu0 0
    %1974 = vmatpush1.bf16.msra.mxu0 0
    %1975 = vmatprep.subr.bf16.mxu0 0
    %1976 = vmatpush1.bf16.msra.mxu0 0
    %1977 = vmatprep.subr.bf16.mxu0 0
    %1978 = vmatpush1.bf16.msra.mxu0 0
    %1979 = vmatprep.subr.bf16.mxu0 0
    %1980 = vmatpush1.bf16.msra.mxu0 0
    %1981 = vmatprep.subr.bf16.mxu0 0
    %1982 = vmatpush1.bf16.msra.mxu0 0
    %1983 = vmatprep.subr.bf16.mxu0 0
    %1984 = vmatpush1.bf16.msra.mxu0 0
    %1985 = vmatprep.subr.bf16.mxu0 0
    %1986 = vmatpush1.bf16.msra.mxu0 0
    %1987 = vmatprep.subr.bf16.mxu0 0
    %1988 = vmatpush1.bf16.msra.mxu0 0
    %1989 = vmatprep.mubr.bf16.mxu0 0
    %1990 = vmatmul.mubr.bf16.gmra.mrb[0].mxu0 %v1864
    %v1991 = vpop.f32.mrb[0].mxu0
    %v1992 = vadd.f32 0.0, %v1991
    %v1993 = vpop.f32.mrb[0].mxu0
    %v1994 = vpop.f32.mrb[0].mxu0
    %v1995 = vadd.f32 0.0, %v1994
    %v1996 = vpop.f32.mrb[0].mxu0
    %1997 = vmatprep.mubr.bf16.mxu0 0
    %1998 = vmatmul.mubr.bf16.gmra.mrb[0].mxu0 %v1867
    %v1999 = vpop.f32.mrb[0].mxu0
    %v2000 = vadd.f32 0.0, %v1999
    %v2001 = vpop.f32.mrb[0].mxu0
    %v2002 = vpop.f32.mrb[0].mxu0
    %v2003 = vadd.f32 0.0, %v2002
    %v2004 = vpop.f32.mrb[0].mxu0
    %2005 = vmatprep.mubr.bf16.mxu0 0
    %2006 = vmatmul.mubr.bf16.gmra.mrb[0].mxu0 %v1870
    %v2007 = vpop.f32.mrb[0].mxu0
    %v2008 = vadd.f32 0.0, %v2007
    %v2009 = vpop.f32.mrb[0].mxu0
    %v2010 = vpop.f32.mrb[0].mxu0
    %v2011 = vadd.f32 0.0, %v2010
    %v2012 = vpop.f32.mrb[0].mxu0
    %2013 = vmatprep.mubr.bf16.mxu0 0
    %2014 = vmatmul.mubr.bf16.gmra.mrb[0].mxu0 %v1873
    %v2015 = vpop.f32.mrb[0].mxu0
    %v2016 = vadd.f32 0.0, %v2015
    %v2017 = vpop.f32.mrb[0].mxu0
    %v2018 = vpop.f32.mrb[0].mxu0
    %v2019 = vadd.f32 0.0, %v2018
    %v2020 = vpop.f32.mrb[0].mxu0
    %2021 = vdwg.mxu0
    %v2022 = vsel %vm382, %v1919, 0.0
    %v2023 = vsel %vm382, %v1921, 0.0
    %v2024 = vsel %vm382, %v1992, 0.0
    %v2025 = vsel %vm383, %v1923, 0.0
    %v2026 = vsel %vm383, %v1925, 0.0
    %v2027 = vsel %vm383, %v1995, 0.0
    %v2028 = vsel %vm384, %v1929, 0.0
    %v2029 = vsel %vm384, %v1931, 0.0
    %v2030 = vsel %vm384, %v2000, 0.0
    %v2031 = vsel %vm385, %v1933, 0.0
    %v2032 = vsel %vm385, %v1935, 0.0
    %v2033 = vsel %vm385, %v2003, 0.0
    %v2034 = vsel %vm386, %v1939, 0.0
    %v2035 = vsel %vm386, %v1941, 0.0
    %v2036 = vsel %vm386, %v2008, 0.0
    %v2037 = vsel %vm387, %v1943, 0.0
    %v2038 = vsel %vm387, %v1945, 0.0
    %v2039 = vsel %vm387, %v2011, 0.0
    %v2040 = vsel %vm388, %v1949, 0.0
    %v2041 = vsel %vm388, %v1951, 0.0
    %v2042 = vsel %vm388, %v2016, 0.0
    %v2043 = vsel %vm389, %v1953, 0.0
    %v2044 = vsel %vm389, %v1955, 0.0
    %v2045 = vsel %vm389, %v2019, 0.0
    %v2046 = vadd.f32 %v1792, %v2022
    %v2047 = vadd.f32 %v1793, %v2023
    %v2048 = vadd.f32 %v1794, %v2024
    %v2049 = vadd.f32 %v1795, %v2025
    %v2050 = vadd.f32 %v1796, %v2026
    %v2051 = vadd.f32 %v1797, %v2027
    %v2052 = vadd.f32 %v1798, %v2028
    %v2053 = vadd.f32 %v1799, %v2029
    %v2054 = vadd.f32 %v1800, %v2030
    %v2055 = vadd.f32 %v1801, %v2031
    %v2056 = vadd.f32 %v1802, %v2032
    %v2057 = vadd.f32 %v1803, %v2033
    %v2058 = vadd.f32 %v1804, %v2034
    %v2059 = vadd.f32 %v1805, %v2035
    %v2060 = vadd.f32 %v1806, %v2036
    %v2061 = vadd.f32 %v1807, %v2037
    %v2062 = vadd.f32 %v1808, %v2038
    %v2063 = vadd.f32 %v1809, %v2039
    %v2064 = vadd.f32 %v1810, %v2040
    %v2065 = vadd.f32 %v1811, %v2041
    %v2066 = vadd.f32 %v1812, %v2042
    %v2067 = vadd.f32 %v1813, %v2043
    %v2068 = vadd.f32 %v1814, %v2044
    %v2069 = vadd.f32 %v1815, %v2045
    %v2070 = vld [vmem:[%s0 + $0x8] sm:$0xf]
    %v2071 = vld [vmem:[%s0 + $0xc] sm:$0xf]
    %v2072 = vld [vmem:[%s0 + $0x10] sm:$0xf]
    %v2073 = vld [vmem:[%s0 + $0x14] sm:$0xf]
    %v2074 = vld [vmem:[%s0 + $0x18] sm:$0xf]
    %v2075 = vld [vmem:[%s0 + $0x1c] sm:$0xf]
    %v2076 = vld [vmem:[%s0 + $0x20] sm:$0xf]
    %v2077 = vld [vmem:[%s0 + $0x24] sm:$0xf]
    %v2078 = vld [vmem:[%s0 + $0x28] sm:$0x1]
    %s2079 = scalar_lea.vmem [#allocation2], 42
    %v2080 = vld [vmem:[%s2079] sm:$0x3f]
    %v2090 = vunpack.c.l.b16 %v2070
    %v2091 = vunpack.c.l.b16 %v2071
    %v2092 = vunpack.c.l.b16 %v2072
    %v2093 = vunpack.c.l.b16 %v2073
    %v2094 = vunpack.c.l.b16 %v2074
    %v2095 = vunpack.c.l.b16 %v2075
    %v2096 = vunpack.c.l.b16 %v2076
    %v2097 = vunpack.c.l.b16 %v2077
    %v2098 = vunpack.c.l.b16 %v2078
    %v2099 = vpack.c.b16 %v2091, %v2090
    %v2100 = vpack.c.b16 %v2093, %v2092
    %v2101 = vpack.c.b16 %v2095, %v2094
    %v2102 = vpack.c.b16 %v2097, %v2096
    %v2103 = vpack.c.b16 %v2098, %v2098
    %v2105 = vshrl.u32 %v2099, 16
    %v2107 = vshll.u32 %v2099, 16
    %v2109 = vrot.slane %v2107, 1
    %v2110 = vor.u32 %v2105, %v2109
    %v2112 = vshll.u32 %v2100, 16
    %v2114 = vrot.slane %v2112, 1
    %v2115 = vsel %vm472, %v2110, %v2114
    %v2116 = vshrl.u32 %v2100, 16
    %v2118 = vor.u32 %v2116, %v2114
    %v2120 = vshll.u32 %v2101, 16
    %v2122 = vrot.slane %v2120, 1
    %v2123 = vsel %vm472, %v2118, %v2122
    %v2124 = vshrl.u32 %v2101, 16
    %v2126 = vor.u32 %v2124, %v2122
    %v2128 = vshll.u32 %v2102, 16
    %v2130 = vrot.slane %v2128, 1
    %v2131 = vsel %vm472, %v2126, %v2130
    %v2132 = vshrl.u32 %v2102, 16
    %v2134 = vor.u32 %v2132, %v2130
    %v2136 = vshll.u32 %v2103, 16
    %v2138 = vrot.slane %v2136, 1
    %v2139 = vsel %vm472, %v2134, %v2138
    %v2141 = vcombine.high %v2080, %v2080
    %v2143 = vunpack.c.l.s4 1983009808
    %v2144 = vunpack.c.0.s8 %v2143
    %v2145 = vlaneseq
    %v2146 = vshrl.u32 %v2145, 7
    %v2147 = vsub.s32 %v2144, %v2146
    %v2148 = vrot.slane %v2080, %v2147
    %v2150 = vunpack.c.l.s4 1983009808
    %v2151 = vunpack.c.0.s8 %v2150
    %v2152 = vlaneseq
    %v2153 = vshrl.u32 %v2152, 7
    %v2154 = vsub.s32 %v2151, %v2153
    %v2155 = vrot.slane %v2141, %v2154
    %v2156 = vcombine.high %v2148, %v2148
    %v2158 = vsel %vm181, %v2115, 0
    %v2161 = vsel %vm181, %v2123, 0
    %v2164 = vsel %vm181, %v2131, 0
    %v2167 = vsel %vm181, %v2139, 0
    %v2170 = vsel %vm194, %v2148, 0
    %v2173 = vsel %vm194, %v2156, 0
    %v2176 = vsel %vm194, %v2155, 0
    %2178 = vmatprep.subr.bf16.mxu0 %v2173
    %2179 = vmatpush1.bf16.msra.mxu0 %v2170
    %2180 = vmatprep.subr.bf16.mxu0 0
    %2181 = vmatpush1.bf16.msra.mxu0 0
    %2182 = vmatprep.subr.bf16.mxu0 0
    %2183 = vmatpush1.bf16.msra.mxu0 0
    %2184 = vmatprep.subr.bf16.mxu0 0
    %2185 = vmatpush1.bf16.msra.mxu0 0
    %2186 = vmatprep.subr.bf16.mxu0 0
    %2187 = vmatpush1.bf16.msra.mxu0 0
    %2188 = vmatprep.subr.bf16.mxu0 0
    %2189 = vmatpush1.bf16.msra.mxu0 0
    %2190 = vmatprep.subr.bf16.mxu0 0
    %2191 = vmatpush1.bf16.msra.mxu0 0
    %2192 = vmatprep.subr.bf16.mxu0 0
    %2193 = vmatpush1.bf16.msra.mxu0 0
    %2194 = vmatprep.subr.bf16.mxu0 0
    %2195 = vmatpush1.bf16.msra.mxu0 0
    %2196 = vmatprep.subr.bf16.mxu0 0
    %2197 = vmatpush1.bf16.msra.mxu0 0
    %2198 = vmatprep.subr.bf16.mxu0 0
    %2199 = vmatpush1.bf16.msra.mxu0 0
    %2200 = vmatprep.subr.bf16.mxu0 0
    %2201 = vmatpush1.bf16.msra.mxu0 0
    %2202 = vmatprep.subr.bf16.mxu0 0
    %2203 = vmatpush1.bf16.msra.mxu0 0
    %2204 = vmatprep.subr.bf16.mxu0 0
    %2205 = vmatpush1.bf16.msra.mxu0 0
    %2206 = vmatprep.subr.bf16.mxu0 0
    %2207 = vmatpush1.bf16.msra.mxu0 0
    %2208 = vmatprep.subr.bf16.mxu0 0
    %2209 = vmatpush1.bf16.msra.mxu0 0
    %2210 = vmatprep.mubr.bf16.mxu0 0
    %2211 = vmatmul.mubr.bf16.gmra.mrb[0].mxu0 %v2158
    %v2212 = vpop.f32.mrb[0].mxu0
    %v2213 = vadd.f32 0.0, %v2212
    %v2214 = vpop.f32.mrb[0].mxu0
    %v2215 = vadd.f32 0.0, %v2214
    %v2216 = vpop.f32.mrb[0].mxu0
    %v2217 = vadd.f32 0.0, %v2216
    %v2218 = vpop.f32.mrb[0].mxu0
    %v2219 = vadd.f32 0.0, %v2218
    %2220 = vmatprep.mubr.bf16.mxu0 0
    %2221 = vmatmul.mubr.bf16.gmra.mrb[0].mxu0 %v2161
    %v2222 = vpop.f32.mrb[0].mxu0
    %v2223 = vadd.f32 0.0, %v2222
    %v2224 = vpop.f32.mrb[0].mxu0
    %v2225 = vadd.f32 0.0, %v2224
    %v2226 = vpop.f32.mrb[0].mxu0
    %v2227 = vadd.f32 0.0, %v2226
    %v2228 = vpop.f32.mrb[0].mxu0
    %v2229 = vadd.f32 0.0, %v2228
    %2230 = vmatprep.mubr.bf16.mxu0 0
    %2231 = vmatmul.mubr.bf16.gmra.mrb[0].mxu0 %v2164
    %v2232 = vpop.f32.mrb[0].mxu0
    %v2233 = vadd.f32 0.0, %v2232
    %v2234 = vpop.f32.mrb[0].mxu0
    %v2235 = vadd.f32 0.0, %v2234
    %v2236 = vpop.f32.mrb[0].mxu0
    %v2237 = vadd.f32 0.0, %v2236
    %v2238 = vpop.f32.mrb[0].mxu0
    %v2239 = vadd.f32 0.0, %v2238
    %2240 = vmatprep.mubr.bf16.mxu0 0
    %2241 = vmatmul.mubr.bf16.gmra.mrb[0].mxu0 %v2167
    %v2242 = vpop.f32.mrb[0].mxu0
    %v2243 = vadd.f32 0.0, %v2242
    %v2244 = vpop.f32.mrb[0].mxu0
    %v2245 = vadd.f32 0.0, %v2244
    %v2246 = vpop.f32.mrb[0].mxu0
    %v2247 = vadd.f32 0.0, %v2246
    %v2248 = vpop.f32.mrb[0].mxu0
    %v2249 = vadd.f32 0.0, %v2248
    %2250 = vdwg.mxu0
    %2251 = vmatprep.subr.bf16.mxu0 0
    %2252 = vmatpush1.bf16.msra.mxu0 %v2176
    %2253 = vmatprep.subr.bf16.mxu0 0
    %2254 = vmatpush1.bf16.msra.mxu0 0
    %2255 = vmatprep.subr.bf16.mxu0 0
    %2256 = vmatpush1.bf16.msra.mxu0 0
    %2257 = vmatprep.subr.bf16.mxu0 0
    %2258 = vmatpush1.bf16.msra.mxu0 0
    %2259 = vmatprep.subr.bf16.mxu0 0
    %2260 = vmatpush1.bf16.msra.mxu0 0
    %2261 = vmatprep.subr.bf16.mxu0 0
    %2262 = vmatpush1.bf16.msra.mxu0 0
    %2263 = vmatprep.subr.bf16.mxu0 0
    %2264 = vmatpush1.bf16.msra.mxu0 0
    %2265 = vmatprep.subr.bf16.mxu0 0
    %2266 = vmatpush1.bf16.msra.mxu0 0
    %2267 = vmatprep.subr.bf16.mxu0 0
    %2268 = vmatpush1.bf16.msra.mxu0 0
    %2269 = vmatprep.subr.bf16.mxu0 0
    %2270 = vmatpush1.bf16.msra.mxu0 0
    %2271 = vmatprep.subr.bf16.mxu0 0
    %2272 = vmatpush1.bf16.msra.mxu0 0
    %2273 = vmatprep.subr.bf16.mxu0 0
    %2274 = vmatpush1.bf16.msra.mxu0 0
    %2275 = vmatprep.subr.bf16.mxu0 0
    %2276 = vmatpush1.bf16.msra.mxu0 0
    %2277 = vmatprep.subr.bf16.mxu0 0
    %2278 = vmatpush1.bf16.msra.mxu0 0
    %2279 = vmatprep.subr.bf16.mxu0 0
    %2280 = vmatpush1.bf16.msra.mxu0 0
    %2281 = vmatprep.subr.bf16.mxu0 0
    %2282 = vmatpush1.bf16.msra.mxu0 0
    %2283 = vmatprep.mubr.bf16.mxu0 0
    %2284 = vmatmul.mubr.bf16.gmra.mrb[0].mxu0 %v2158
    %v2285 = vpop.f32.mrb[0].mxu0
    %v2286 = vadd.f32 0.0, %v2285
    %v2287 = vpop.f32.mrb[0].mxu0
    %v2288 = vpop.f32.mrb[0].mxu0
    %v2289 = vadd.f32 0.0, %v2288
    %v2290 = vpop.f32.mrb[0].mxu0
    %2291 = vmatprep.mubr.bf16.mxu0 0
    %2292 = vmatmul.mubr.bf16.gmra.mrb[0].mxu0 %v2161
    %v2293 = vpop.f32.mrb[0].mxu0
    %v2294 = vadd.f32 0.0, %v2293
    %v2295 = vpop.f32.mrb[0].mxu0
    %v2296 = vpop.f32.mrb[0].mxu0
    %v2297 = vadd.f32 0.0, %v2296
    %v2298 = vpop.f32.mrb[0].mxu0
    %2299 = vmatprep.mubr.bf16.mxu0 0
    %2300 = vmatmul.mubr.bf16.gmra.mrb[0].mxu0 %v2164
    %v2301 = vpop.f32.mrb[0].mxu0
    %v2302 = vadd.f32 0.0, %v2301
    %v2303 = vpop.f32.mrb[0].mxu0
    %v2304 = vpop.f32.mrb[0].mxu0
    %v2305 = vadd.f32 0.0, %v2304
    %v2306 = vpop.f32.mrb[0].mxu0
    %2307 = vmatprep.mubr.bf16.mxu0 0
    %2308 = vmatmul.mubr.bf16.gmra.mrb[0].mxu0 %v2167
    %v2309 = vpop.f32.mrb[0].mxu0
    %v2310 = vadd.f32 0.0, %v2309
    %v2311 = vpop.f32.mrb[0].mxu0
    %v2312 = vpop.f32.mrb[0].mxu0
    %v2313 = vadd.f32 0.0, %v2312
    %v2314 = vpop.f32.mrb[0].mxu0
    %2315 = vdwg.mxu0
    %v2316 = vadd.f32 %v2046, %v2213
    %v2317 = vadd.f32 %v2047, %v2215
    %v2318 = vadd.f32 %v2048, %v2286
    %v2319 = vadd.f32 %v2049, %v2217
    %v2320 = vadd.f32 %v2050, %v2219
    %v2321 = vadd.f32 %v2051, %v2289
    %v2322 = vadd.f32 %v2052, %v2223
    %v2323 = vadd.f32 %v2053, %v2225
    %v2324 = vadd.f32 %v2054, %v2294
    %v2325 = vadd.f32 %v2055, %v2227
    %v2326 = vadd.f32 %v2056, %v2229
    %v2327 = vadd.f32 %v2057, %v2297
    %v2328 = vadd.f32 %v2058, %v2233
    %v2329 = vadd.f32 %v2059, %v2235
    %v2330 = vadd.f32 %v2060, %v2302
    %v2331 = vadd.f32 %v2061, %v2237
    %v2332 = vadd.f32 %v2062, %v2239
    %v2333 = vadd.f32 %v2063, %v2305
    %v2334 = vadd.f32 %v2064, %v2243
    %v2335 = vadd.f32 %v2065, %v2245
    %v2336 = vadd.f32 %v2066, %v2310
    %v2337 = vadd.f32 %v2067, %v2247
    %v2338 = vadd.f32 %v2068, %v2249
    %v2339 = vadd.f32 %v2069, %v2313
    %v2340 = vld [vmem:[%s0 + $0x8] sm:$0xe]
    %v2341 = vld [vmem:[%s0 + $0xc] sm:$0xf]
    %v2342 = vld [vmem:[%s0 + $0x10] sm:$0xf]
    %v2343 = vld [vmem:[%s0 + $0x14] sm:$0xf]
    %v2344 = vld [vmem:[%s0 + $0x18] sm:$0xf]
    %v2345 = vld [vmem:[%s0 + $0x1c] sm:$0xf]
    %v2346 = vld [vmem:[%s0 + $0x20] sm:$0xf]
    %v2347 = vld [vmem:[%s0 + $0x24] sm:$0xf]
    %v2348 = vld [vmem:[%s0 + $0x28] sm:$0x1]
    %s2349 = scalar_lea.vmem [#allocation2], 48
    %v2350 = vld [vmem:[%s2349] sm:$0x3f]
    %v2360 = vunpack.c.l.b16 %v2340
    %v2361 = vunpack.c.l.b16 %v2341
    %v2362 = vunpack.c.l.b16 %v2342
    %v2363 = vunpack.c.l.b16 %v2343
    %v2364 = vunpack.c.l.b16 %v2344
    %v2365 = vunpack.c.l.b16 %v2345
    %v2366 = vunpack.c.l.b16 %v2346
    %v2367 = vunpack.c.l.b16 %v2347
    %v2368 = vunpack.c.l.b16 %v2348
    %v2369 = vpack.c.b16 %v2361, %v2360
    %v2370 = vpack.c.b16 %v2363, %v2362
    %v2371 = vpack.c.b16 %v2365, %v2364
    %v2372 = vpack.c.b16 %v2367, %v2366
    %v2373 = vpack.c.b16 %v2368, %v2368
    %v2374 = vrot.slane %v2369, 1
    %v2375 = vrot.slane %v2370, 1
    %v2376 = vsel %vm743, %v2374, %v2375
    %v2377 = vrot.slane %v2371, 1
    %v2378 = vsel %vm743, %v2375, %v2377
    %v2379 = vrot.slane %v2372, 1
    %v2380 = vsel %vm743, %v2377, %v2379
    %v2381 = vrot.slane %v2373, 1
    %v2382 = vsel %vm743, %v2379, %v2381
    %v2384 = vcombine.high %v2350, %v2350
    %v2386 = vunpack.c.l.s4 1983009808
    %v2387 = vunpack.c.0.s8 %v2386
    %v2388 = vlaneseq
    %v2389 = vshrl.u32 %v2388, 7
    %v2390 = vsub.s32 %v2387, %v2389
    %v2391 = vrot.slane %v2350, %v2390
    %v2393 = vunpack.c.l.s4 1983009808
    %v2394 = vunpack.c.0.s8 %v2393
    %v2395 = vlaneseq
    %v2396 = vshrl.u32 %v2395, 7
    %v2397 = vsub.s32 %v2394, %v2396
    %v2398 = vrot.slane %v2384, %v2397
    %v2399 = vcombine.high %v2391, %v2391
    %v2401 = vsel %vm181, %v2376, 0
    %v2404 = vsel %vm181, %v2378, 0
    %v2407 = vsel %vm181, %v2380, 0
    %v2410 = vsel %vm181, %v2382, 0
    %v2413 = vsel %vm194, %v2391, 0
    %v2416 = vsel %vm194, %v2399, 0
    %v2419 = vsel %vm194, %v2398, 0
    %2421 = vmatprep.subr.bf16.mxu0 %v2416
    %2422 = vmatpush1.bf16.msra.mxu0 %v2413
    %2423 = vmatprep.subr.bf16.mxu0 0
    %2424 = vmatpush1.bf16.msra.mxu0 0
    %2425 = vmatprep.subr.bf16.mxu0 0
    %2426 = vmatpush1.bf16.msra.mxu0 0
    %2427 = vmatprep.subr.bf16.mxu0 0
    %2428 = vmatpush1.bf16.msra.mxu0 0
    %2429 = vmatprep.subr.bf16.mxu0 0
    %2430 = vmatpush1.bf16.msra.mxu0 0
    %2431 = vmatprep.subr.bf16.mxu0 0
    %2432 = vmatpush1.bf16.msra.mxu0 0
    %2433 = vmatprep.subr.bf16.mxu0 0
    %2434 = vmatpush1.bf16.msra.mxu0 0
    %2435 = vmatprep.subr.bf16.mxu0 0
    %2436 = vmatpush1.bf16.msra.mxu0 0
    %2437 = vmatprep.subr.bf16.mxu0 0
    %2438 = vmatpush1.bf16.msra.mxu0 0
    %2439 = vmatprep.subr.bf16.mxu0 0
    %2440 = vmatpush1.bf16.msra.mxu0 0
    %2441 = vmatprep.subr.bf16.mxu0 0
    %2442 = vmatpush1.bf16.msra.mxu0 0
    %2443 = vmatprep.subr.bf16.mxu0 0
    %2444 = vmatpush1.bf16.msra.mxu0 0
    %2445 = vmatprep.subr.bf16.mxu0 0
    %2446 = vmatpush1.bf16.msra.mxu0 0
    %2447 = vmatprep.subr.bf16.mxu0 0
    %2448 = vmatpush1.bf16.msra.mxu0 0
    %2449 = vmatprep.subr.bf16.mxu0 0
    %2450 = vmatpush1.bf16.msra.mxu0 0
    %2451 = vmatprep.subr.bf16.mxu0 0
    %2452 = vmatpush1.bf16.msra.mxu0 0
    %2453 = vmatprep.mubr.bf16.mxu0 0
    %2454 = vmatmul.mubr.bf16.gmra.mrb[0].mxu0 %v2401
    %v2455 = vpop.f32.mrb[0].mxu0
    %v2456 = vadd.f32 0.0, %v2455
    %v2457 = vpop.f32.mrb[0].mxu0
    %v2458 = vadd.f32 0.0, %v2457
    %v2459 = vpop.f32.mrb[0].mxu0
    %v2460 = vadd.f32 0.0, %v2459
    %v2461 = vpop.f32.mrb[0].mxu0
    %v2462 = vadd.f32 0.0, %v2461
    %2463 = vmatprep.mubr.bf16.mxu0 0
    %2464 = vmatmul.mubr.bf16.gmra.mrb[0].mxu0 %v2404
    %v2465 = vpop.f32.mrb[0].mxu0
    %v2466 = vadd.f32 0.0, %v2465
    %v2467 = vpop.f32.mrb[0].mxu0
    %v2468 = vadd.f32 0.0, %v2467
    %v2469 = vpop.f32.mrb[0].mxu0
    %v2470 = vadd.f32 0.0, %v2469
    %v2471 = vpop.f32.mrb[0].mxu0
    %v2472 = vadd.f32 0.0, %v2471
    %2473 = vmatprep.mubr.bf16.mxu0 0
    %2474 = vmatmul.mubr.bf16.gmra.mrb[0].mxu0 %v2407
    %v2475 = vpop.f32.mrb[0].mxu0
    %v2476 = vadd.f32 0.0, %v2475
    %v2477 = vpop.f32.mrb[0].mxu0
    %v2478 = vadd.f32 0.0, %v2477
    %v2479 = vpop.f32.mrb[0].mxu0
    %v2480 = vadd.f32 0.0, %v2479
    %v2481 = vpop.f32.mrb[0].mxu0
    %v2482 = vadd.f32 0.0, %v2481
    %2483 = vmatprep.mubr.bf16.mxu0 0
    %2484 = vmatmul.mubr.bf16.gmra.mrb[0].mxu0 %v2410
    %v2485 = vpop.f32.mrb[0].mxu0
    %v2486 = vadd.f32 0.0, %v2485
    %v2487 = vpop.f32.mrb[0].mxu0
    %v2488 = vadd.f32 0.0, %v2487
    %v2489 = vpop.f32.mrb[0].mxu0
    %v2490 = vadd.f32 0.0, %v2489
    %v2491 = vpop.f32.mrb[0].mxu0
    %v2492 = vadd.f32 0.0, %v2491
    %2493 = vdwg.mxu0
    %2494 = vmatprep.subr.bf16.mxu0 0
    %2495 = vmatpush1.bf16.msra.mxu0 %v2419
    %2496 = vmatprep.subr.bf16.mxu0 0
    %2497 = vmatpush1.bf16.msra.mxu0 0
    %2498 = vmatprep.subr.bf16.mxu0 0
    %2499 = vmatpush1.bf16.msra.mxu0 0
    %2500 = vmatprep.subr.bf16.mxu0 0
    %2501 = vmatpush1.bf16.msra.mxu0 0
    %2502 = vmatprep.subr.bf16.mxu0 0
    %2503 = vmatpush1.bf16.msra.mxu0 0
    %2504 = vmatprep.subr.bf16.mxu0 0
    %2505 = vmatpush1.bf16.msra.mxu0 0
    %2506 = vmatprep.subr.bf16.mxu0 0
    %2507 = vmatpush1.bf16.msra.mxu0 0
    %2508 = vmatprep.subr.bf16.mxu0 0
    %2509 = vmatpush1.bf16.msra.mxu0 0
    %2510 = vmatprep.subr.bf16.mxu0 0
    %2511 = vmatpush1.bf16.msra.mxu0 0
    %2512 = vmatprep.subr.bf16.mxu0 0
    %2513 = vmatpush1.bf16.msra.mxu0 0
    %2514 = vmatprep.subr.bf16.mxu0 0
    %2515 = vmatpush1.bf16.msra.mxu0 0
    %2516 = vmatprep.subr.bf16.mxu0 0
    %2517 = vmatpush1.bf16.msra.mxu0 0
    %2518 = vmatprep.subr.bf16.mxu0 0
    %2519 = vmatpush1.bf16.msra.mxu0 0
    %2520 = vmatprep.subr.bf16.mxu0 0
    %2521 = vmatpush1.bf16.msra.mxu0 0
    %2522 = vmatprep.subr.bf16.mxu0 0
    %2523 = vmatpush1.bf16.msra.mxu0 0
    %2524 = vmatprep.subr.bf16.mxu0 0
    %2525 = vmatpush1.bf16.msra.mxu0 0
    %2526 = vmatprep.mubr.bf16.mxu0 0
    %2527 = vmatmul.mubr.bf16.gmra.mrb[0].mxu0 %v2401
    %v2528 = vpop.f32.mrb[0].mxu0
    %v2529 = vadd.f32 0.0, %v2528
    %v2530 = vpop.f32.mrb[0].mxu0
    %v2531 = vpop.f32.mrb[0].mxu0
    %v2532 = vadd.f32 0.0, %v2531
    %v2533 = vpop.f32.mrb[0].mxu0
    %2534 = vmatprep.mubr.bf16.mxu0 0
    %2535 = vmatmul.mubr.bf16.gmra.mrb[0].mxu0 %v2404
    %v2536 = vpop.f32.mrb[0].mxu0
    %v2537 = vadd.f32 0.0, %v2536
    %v2538 = vpop.f32.mrb[0].mxu0
    %v2539 = vpop.f32.mrb[0].mxu0
    %v2540 = vadd.f32 0.0, %v2539
    %v2541 = vpop.f32.mrb[0].mxu0
    %2542 = vmatprep.mubr.bf16.mxu0 0
    %2543 = vmatmul.mubr.bf16.gmra.mrb[0].mxu0 %v2407
    %v2544 = vpop.f32.mrb[0].mxu0
    %v2545 = vadd.f32 0.0, %v2544
    %v2546 = vpop.f32.mrb[0].mxu0
    %v2547 = vpop.f32.mrb[0].mxu0
    %v2548 = vadd.f32 0.0, %v2547
    %v2549 = vpop.f32.mrb[0].mxu0
    %2550 = vmatprep.mubr.bf16.mxu0 0
    %2551 = vmatmul.mubr.bf16.gmra.mrb[0].mxu0 %v2410
    %v2552 = vpop.f32.mrb[0].mxu0
    %v2553 = vadd.f32 0.0, %v2552
    %v2554 = vpop.f32.mrb[0].mxu0
    %v2555 = vpop.f32.mrb[0].mxu0
    %v2556 = vadd.f32 0.0, %v2555
    %v2557 = vpop.f32.mrb[0].mxu0
    %2558 = vdwg.mxu0
    %v2559 = vsel %vm969, %v2456, 0.0
    %v2560 = vsel %vm969, %v2458, 0.0
    %v2561 = vsel %vm969, %v2529, 0.0
    %v2562 = vsel %vm970, %v2460, 0.0
    %v2563 = vsel %vm970, %v2462, 0.0
    %v2564 = vsel %vm970, %v2532, 0.0
    %v2565 = vsel %vm971, %v2466, 0.0
    %v2566 = vsel %vm971, %v2468, 0.0
    %v2567 = vsel %vm971, %v2537, 0.0
    %v2568 = vsel %vm972, %v2470, 0.0
    %v2569 = vsel %vm972, %v2472, 0.0
    %v2570 = vsel %vm972, %v2540, 0.0
    %v2571 = vsel %vm973, %v2476, 0.0
    %v2572 = vsel %vm973, %v2478, 0.0
    %v2573 = vsel %vm973, %v2545, 0.0
    %v2574 = vsel %vm974, %v2480, 0.0
    %v2575 = vsel %vm974, %v2482, 0.0
    %v2576 = vsel %vm974, %v2548, 0.0
    %v2577 = vsel %vm975, %v2486, 0.0
    %v2578 = vsel %vm975, %v2488, 0.0
    %v2579 = vsel %vm975, %v2553, 0.0
    %v2580 = vsel %vm976, %v2490, 0.0
    %v2581 = vsel %vm976, %v2492, 0.0
    %v2582 = vsel %vm976, %v2556, 0.0
    %v2583 = vadd.f32 %v2316, %v2559
    %v2584 = vadd.f32 %v2317, %v2560
    %v2585 = vadd.f32 %v2318, %v2561
    %v2586 = vadd.f32 %v2319, %v2562
    %v2587 = vadd.f32 %v2320, %v2563
    %v2588 = vadd.f32 %v2321, %v2564
    %v2589 = vadd.f32 %v2322, %v2565
    %v2590 = vadd.f32 %v2323, %v2566
    %v2591 = vadd.f32 %v2324, %v2567
    %v2592 = vadd.f32 %v2325, %v2568
    %v2593 = vadd.f32 %v2326, %v2569
    %v2594 = vadd.f32 %v2327, %v2570
    %v2595 = vadd.f32 %v2328, %v2571
    %v2596 = vadd.f32 %v2329, %v2572
    %v2597 = vadd.f32 %v2330, %v2573
    %v2598 = vadd.f32 %v2331, %v2574
    %v2599 = vadd.f32 %v2332, %v2575
    %v2600 = vadd.f32 %v2333, %v2576
    %v2601 = vadd.f32 %v2334, %v2577
    %v2602 = vadd.f32 %v2335, %v2578
    %v2603 = vadd.f32 %v2336, %v2579
    %v2604 = vadd.f32 %v2337, %v2580
    %v2605 = vadd.f32 %v2338, %v2581
    %v2606 = vadd.f32 %v2339, %v2582
    %v2607 = vld [vmem:[%s2] sm:$0x7]
    %v2609 = vlaneseq
    %v2610 = vshrl.u32 %v2609, 7
    %v2611 = vsub.s32 0, %v2610
    %v2612 = vrot.slane %v2607, %v2611
    %v2613 = vlaneseq
    %v2614 = vshrl.u32 %v2613, 7
    %v2615 = vsub.s32 1, %v2614
    %v2616 = vrot.slane %v2607, %v2615
    %v2617 = vlaneseq
    %v2618 = vshrl.u32 %v2617, 7
    %v2619 = vsub.s32 2, %v2618
    %v2620 = vrot.slane %v2607, %v2619
    %v2624 = vadd.f32 %v2583, %v2612
    %v2625 = vadd.f32 %v2584, %v2616
    %v2626 = vadd.f32 %v2585, %v2620
    %v2627 = vadd.f32 %v2586, %v2612
    %v2628 = vadd.f32 %v2587, %v2616
    %v2629 = vadd.f32 %v2588, %v2620
    %v2630 = vadd.f32 %v2589, %v2612
    %v2631 = vadd.f32 %v2590, %v2616
    %v2632 = vadd.f32 %v2591, %v2620
    %v2633 = vadd.f32 %v2592, %v2612
    %v2634 = vadd.f32 %v2593, %v2616
    %v2635 = vadd.f32 %v2594, %v2620
    %v2636 = vadd.f32 %v2595, %v2612
    %v2637 = vadd.f32 %v2596, %v2616
    %v2638 = vadd.f32 %v2597, %v2620
    %v2639 = vadd.f32 %v2598, %v2612
    %v2640 = vadd.f32 %v2599, %v2616
    %v2641 = vadd.f32 %v2600, %v2620
    %v2642 = vadd.f32 %v2601, %v2612
    %v2643 = vadd.f32 %v2602, %v2616
    %v2644 = vadd.f32 %v2603, %v2620
    %v2645 = vadd.f32 %v2604, %v2612
    %v2646 = vadd.f32 %v2605, %v2616
    %v2647 = vadd.f32 %v2606, %v2620
    %v2648 = vpack.c.bf16 %v2627, %v2624
    %v2649 = vpack.c.bf16 %v2628, %v2625
    %v2650 = vpack.c.bf16 %v2629, %v2626
    %v2651 = vpack.c.bf16 %v2633, %v2630
    %v2652 = vpack.c.bf16 %v2634, %v2631
    %v2653 = vpack.c.bf16 %v2635, %v2632
    %v2654 = vpack.c.bf16 %v2639, %v2636
    %v2655 = vpack.c.bf16 %v2640, %v2637
    %v2656 = vpack.c.bf16 %v2641, %v2638
    %v2657 = vpack.c.bf16 %v2645, %v2642
    %v2658 = vpack.c.bf16 %v2646, %v2643
    %v2659 = vpack.c.bf16 %v2647, %v2644
    %v2672 = vunpack.c.l.b16 %v2648
    %v2673 = vunpack.c.l.b16 %v2649
    %v2674 = vunpack.c.l.b16 %v2650
    %v2675 = vunpack.c.h.b16 %v2648
    %v2676 = vunpack.c.h.b16 %v2649
    %v2677 = vunpack.c.h.b16 %v2650
    %v2678 = vunpack.c.l.b16 %v2651
    %v2679 = vunpack.c.l.b16 %v2652
    %v2680 = vunpack.c.l.b16 %v2653
    %v2681 = vunpack.c.h.b16 %v2651
    %v2682 = vunpack.c.h.b16 %v2652
    %v2683 = vunpack.c.h.b16 %v2653
    %v2684 = vunpack.c.l.b16 %v2654
    %v2685 = vunpack.c.l.b16 %v2655
    %v2686 = vunpack.c.l.b16 %v2656
    %v2687 = vunpack.c.h.b16 %v2654
    %v2688 = vunpack.c.h.b16 %v2655
    %v2689 = vunpack.c.h.b16 %v2656
    %v2690 = vunpack.c.l.b16 %v2657
    %v2691 = vunpack.c.l.b16 %v2658
    %v2692 = vunpack.c.l.b16 %v2659
    %v2693 = vunpack.c.h.b16 %v2657
    %v2694 = vunpack.c.h.b16 %v2658
    %v2695 = vunpack.c.h.b16 %v2659
    %v2696 = vpack.c.b16 %v2673, %v2672
    %v2697 = vpack.c.b16 %v2674, %v2674
    %v2698 = vpack.c.b16 %v2676, %v2675
    %v2699 = vpack.c.b16 %v2677, %v2677
    %v2700 = vpack.c.b16 %v2679, %v2678
    %v2701 = vpack.c.b16 %v2680, %v2680
    %v2702 = vpack.c.b16 %v2682, %v2681
    %v2703 = vpack.c.b16 %v2683, %v2683
    %v2704 = vpack.c.b16 %v2685, %v2684
    %v2705 = vpack.c.b16 %v2686, %v2686
    %v2706 = vpack.c.b16 %v2688, %v2687
    %v2707 = vpack.c.b16 %v2689, %v2689
    %v2708 = vpack.c.b16 %v2691, %v2690
    %v2709 = vpack.c.b16 %v2692, %v2692
    %v2710 = vpack.c.b16 %v2694, %v2693
    %v2711 = vpack.c.b16 %v2695, %v2695
    %2728 = vst [vmem:[#allocation5] sm:$0xff] %v2696
    %vm2729 = vcmask 519168
    %2730 = vst.msk [vmem:[#allocation5 + $0x8] sm:$0xf] %vm2729, %v2697
    %2731 = vst [vmem:[#allocation5 + $0xc] sm:$0xff] %v2698
    %2732 = vst.msk [vmem:[#allocation5 + $0x14] sm:$0xf] %vm2729, %v2699
    %2733 = vst [vmem:[#allocation5 + $0x18] sm:$0xff] %v2700
    %2734 = vst.msk [vmem:[#allocation5 + $0x20] sm:$0xf] %vm2729, %v2701
    %2735 = vst [vmem:[#allocation5 + $0x24] sm:$0xff] %v2702
    %2736 = vst.msk [vmem:[#allocation5 + $0x2c] sm:$0xf] %vm2729, %v2703
    %2737 = vst [vmem:[#allocation5 + $0x30] sm:$0xff] %v2704
    %2738 = vst.msk [vmem:[#allocation5 + $0x38] sm:$0xf] %vm2729, %v2705
    %2739 = vst [vmem:[#allocation5 + $0x3c] sm:$0xff] %v2706
    %2740 = vst.msk [vmem:[#allocation5 + $0x44] sm:$0xf] %vm2729, %v2707
    %2741 = vst [vmem:[#allocation5 + $0x48] sm:$0xff] %v2708
    %2742 = vst.msk [vmem:[#allocation5 + $0x50] sm:$0xf] %vm2729, %v2709
    %2743 = vst [vmem:[#allocation5 + $0x54] sm:$0xff] %v2710
    %2744 = vst.msk [vmem:[#allocation5 + $0x5c] sm:$0xf] %vm2729, %v2711
    // Predicated region
    $region18: #{tpu_custom_call.1} parent=1 // pred_check
      _
    $region19: #{tpu_custom_call.1} parent=1 // pred_check_branch
      %2746 = sbr.rel (0) target = $region21
    $region20: #{tpu_custom_call.1} parent=1 // pred_region
      %s2748 = ssub.s32 1536, 1536
      %2749 = vsyncadd [#allocation4], %s2748
      %s2750 = sshll.u32 [#allocation5], 4
      %s2751 = int_to_ptr.vmem [resolvable:$true] %s2750
      %2756 = dma.vmem_to_hbm [thread:$0]  %s2751, 1536, %s3, [#allocation4], 192, 192, 12
    $region21: #{tpu_custom_call.1} parent=1 // pred_fallthru
      _
    // Predicated region
    $region22: #{tpu_custom_call.1} parent=1 // pred_check
      _
    $region23: #{tpu_custom_call.1} parent=1 // pred_check_branch
      %2758 = sbr.rel (0) target = $region25
    $region24: #{tpu_custom_call.1} parent=1 // pred_region
      %2759 = dma.done [#allocation4], 1536
    $region25: #{tpu_custom_call.1} parent=1 // pred_fallthru
      _
    %2760 = vsyncpa [#allocation3], 1
    %2761 = vsyncpa [#allocation4], 1

</llo_original>
